<compile_context>
chip_gen: v7x
topology: tpu7x:2x2x1
jax: 0.10.0
libtpu: 0.0.40
codegen_flags: <defaults>
</compile_context>

<pallas_src>
import jax
import jax.numpy as jnp
from jax.experimental import pallas as pl
from jax.experimental.pallas import tpu as pltpu

EPS = 1e-5            # RMSNorm eps (olmo_core default)
ROPE_THETA = 500_000.0
MASK_VAL = -1e30


def _rms_norm_f32(x_f32, w_ref):
    var = jnp.mean(x_f32 * x_f32, axis=-1, keepdims=True)
    return x_f32 * jax.lax.rsqrt(var + EPS) * w_ref[0].astype(jnp.float32)


def _rope(t_f32, cos, sin_signed):
    # rotate-half RoPE: rot(t) * sin == roll(t, hd/2) * [-sin_half, +sin_half],
    # so a single lane roll (XLU) replaces the slice/negate/concatenate.
    hd = t_f32.shape[-1]
    return t_f32 * cos + pltpu.roll(t_f32, shift=hd // 2, axis=1) * sin_signed


# ---------------------------------------------------------------------------
# Kernel 1: RMSNorm + per-head Q/K/V projections with fused RoPE + q-scaling
# ---------------------------------------------------------------------------
def qkv_proj_kernel(x_ref, anw_ref, cos_ref, sin_ref, wq_ref, wk_ref, wv_ref,
                    q_ref, k_ref, v_ref, xn_ref, *, scale):
    ni = pl.program_id(2)

    @pl.when(ni == 0)
    def _():
        xn = _rms_norm_f32(x_ref[0].astype(jnp.float32), anw_ref)
        xn_ref[...] = xn.astype(jnp.bfloat16)

    xn = xn_ref[...]                                            # (ts, D) bf16
    cos = cos_ref[...]
    sin = sin_ref[...]
    q = jnp.dot(xn, wq_ref[...], preferred_element_type=jnp.float32)
    k = jnp.dot(xn, wk_ref[...], preferred_element_type=jnp.float32)
    q_ref[0] = (_rope(q, cos, sin) * scale).astype(q_ref.dtype)
    k_ref[0] = _rope(k, cos, sin).astype(k_ref.dtype)
    v_ref[0] = jnp.dot(xn, wv_ref[...],
                       preferred_element_type=jnp.float32).astype(v_ref.dtype)


# ---------------------------------------------------------------------------
# Kernel 2: causal flash attention (online softmax), per head
# ---------------------------------------------------------------------------
def flash_attn_kernel(q_ref, k_ref, v_ref, o_ref, m_ref, l_ref, acc_ref):
    qi = pl.program_id(2)
    ki = pl.program_id(3)

    @pl.when(ki == 0)
    def _():
        m_ref[...] = jnp.full(m_ref.shape, -jnp.inf, jnp.float32)
        l_ref[...] = jnp.zeros(l_ref.shape, jnp.float32)
        acc_ref[...] = jnp.zeros(acc_ref.shape, jnp.float32)

    @pl.when(ki <= qi)                       # skip tiles above the causal diag
    def _():
        # q @ k.T without materializing a transposed copy of k (both pre-roped)
        s = jax.lax.dot_general(
            q_ref[0], k_ref[0],
            (((1,), (1,)), ((), ())),
            preferred_element_type=jnp.float32)                 # (tq, tk) f32

        tq, tk = s.shape
        qpos = qi * tq + jax.lax.broadcasted_iota(jnp.int32, (tq, tk), 0)
        kpos = ki * tk + jax.lax.broadcasted_iota(jnp.int32, (tq, tk), 1)
        s = jnp.where(kpos <= qpos, s, MASK_VAL)

        m_prev = m_ref[...]
        m_new = jnp.maximum(m_prev, jnp.max(s, axis=-1, keepdims=True))
        alpha = jnp.exp(m_prev - m_new)
        p = jnp.exp(s - m_new)
        l_ref[...] = alpha * l_ref[...] + jnp.sum(p, axis=-1, keepdims=True)
        acc_ref[...] = alpha * acc_ref[...] + jnp.dot(
            p.astype(jnp.bfloat16), v_ref[0],
            preferred_element_type=jnp.float32)
        m_ref[...] = m_new

    @pl.when(ki == qi)                       # diagonal tile = last contribution
    def _():
        inv_l = pl.reciprocal(l_ref[...], approx=True)
        o_ref[0] = (acc_ref[...] * inv_l).astype(o_ref.dtype)


# ---------------------------------------------------------------------------
# Kernel 3: out-projection + residual + RMSNorm + H-tiled SwiGLU FFN + residual
# ---------------------------------------------------------------------------
def out_ffn_kernel(x_ref, av_ref, wo_ref, fnw_ref, w1_ref, w3_ref, w2_ref,
                   o_ref, h_ref, hn_ref, acc_ref):
    hi = pl.program_id(2)

    @pl.when(hi == 0)
    def _():
        attn = jnp.dot(av_ref[0], wo_ref[...],
                       preferred_element_type=jnp.float32)      # (ts, D) f32
        h = x_ref[0].astype(jnp.float32) + attn
        h_ref[...] = h
        hn = _rms_norm_f32(h, fnw_ref)
        hn_ref[...] = hn.astype(jnp.bfloat16)
        acc_ref[...] = jnp.zeros(acc_ref.shape, jnp.float32)

    hn = hn_ref[...]                                            # (ts, D) bf16
    a = jnp.dot(hn, w1_ref[...], preferred_element_type=jnp.float32)
    b = jnp.dot(hn, w3_ref[...], preferred_element_type=jnp.float32)
    g = (a * jax.nn.sigmoid(a)) * b                             # SiLU * gate
    acc_ref[...] += jnp.dot(g.astype(jnp.bfloat16), w2_ref[...],
                            preferred_element_type=jnp.float32)

    @pl.when(hi == pl.num_programs(2) - 1)
    def _():
        o_ref[0] = (h_ref[...] + acc_ref[...]).astype(o_ref.dtype)


# ---------------------------------------------------------------------------
# Wrapper
# ---------------------------------------------------------------------------
def transformer_block(x, params, *, n_heads, seq_tile=128, ffn_h_tile=256):
    B, S, D = x.shape
    hd = D // n_heads
    H = params["w1"].shape[1]

    ts = min(seq_tile, S)
    th = min(ffn_h_tile, H)
    assert S % ts == 0 and H % th == 0 and D % n_heads == 0
    assert hd % 128 == 0, "head_dim must be a multiple of 128 for lane-dense tiles"

    bf16 = jnp.bfloat16
    wq = params["wq"].astype(bf16)
    wk = params["wk"].astype(bf16)
    wv = params["wv"].astype(bf16)
    wo = params["wo"].astype(bf16)
    w1 = params["w1"].astype(bf16)
    w2 = params["w2"].astype(bf16)
    w3 = params["w3"].astype(bf16)
    anw = params["attn_norm_w"]
    fnw = params["ffn_norm_w"]

    cos = params["rope_cos"].astype(jnp.float32)                 # (S, hd)
    sin = params["rope_sin"].astype(jnp.float32)
    # fold the rotate-half sign into the sin table -> kernel only needs a roll
    sin_signed = jnp.concatenate([-sin[:, : hd // 2], sin[:, hd // 2:]], axis=-1)

    def cparams(sem):
        return pltpu.CompilerParams(dimension_semantics=sem,
                                    vmem_limit_bytes=48 * 1024 * 1024)

    # --------- kernel 1: RMSNorm + per-head QKV projection + RoPE ------------
    import functools
    qkv_shape = jax.ShapeDtypeStruct((B, S, D), bf16)
    q, k, v = pl.pallas_call(
        functools.partial(qkv_proj_kernel, scale=1.0 / (hd ** 0.5)),
        grid=(B, S // ts, n_heads),
        in_specs=[
            pl.BlockSpec((1, ts, D), lambda b, si, ni: (b, si, 0)),
            pl.BlockSpec((1, D), lambda b, si, ni: (0, 0)),
            pl.BlockSpec((ts, hd), lambda b, si, ni: (si, 0)),
            pl.BlockSpec((ts, hd), lambda b, si, ni: (si, 0)),
            pl.BlockSpec((D, hd), lambda b, si, ni: (0, ni)),
            pl.BlockSpec((D, hd), lambda b, si, ni: (0, ni)),
            pl.BlockSpec((D, hd), lambda b, si, ni: (0, ni)),
        ],
        out_specs=[
            pl.BlockSpec((1, ts, hd), lambda b, si, ni: (b, si, ni)),
            pl.BlockSpec((1, ts, hd), lambda b, si, ni: (b, si, ni)),
            pl.BlockSpec((1, ts, hd), lambda b, si, ni: (b, si, ni)),
        ],
        out_shape=(qkv_shape, qkv_shape, qkv_shape),
        scratch_shapes=[pltpu.VMEM((ts, D), bf16)],
        compiler_params=cparams(("parallel", "parallel", "arbitrary")),
    )(x, anw, cos, sin_signed, wq, wk, wv)

    # ----------------- kernel 2: causal flash attention ----------------------
    nq = S // ts
    av = pl.pallas_call(
        flash_attn_kernel,
        grid=(B, n_heads, nq, nq),
        in_specs=[
            pl.BlockSpec((1, ts, hd), lambda b, h, qi, ki: (b, qi, h)),
            pl.BlockSpec((1, ts, hd),
                         lambda b, h, qi, ki: (b, jnp.minimum(ki, qi), h)),
            pl.BlockSpec((1, ts, hd),
                         lambda b, h, qi, ki: (b, jnp.minimum(ki, qi), h)),
        ],
        out_specs=pl.BlockSpec((1, ts, hd), lambda b, h, qi, ki: (b, qi, h)),
        out_shape=jax.ShapeDtypeStruct((B, S, D), bf16),
        scratch_shapes=[
            pltpu.VMEM((ts, 1), jnp.float32),    # running max m
            pltpu.VMEM((ts, 1), jnp.float32),    # running denom l
            pltpu.VMEM((ts, hd), jnp.float32),   # output accumulator
        ],
        compiler_params=cparams(("parallel", "parallel", "parallel", "arbitrary")),
    )(q, k, v)

    # ----------- kernel 3: out-proj + residual + H-tiled SwiGLU FFN ----------
    out = pl.pallas_call(
        out_ffn_kernel,
        grid=(B, S // ts, H // th),
        in_specs=[
            pl.BlockSpec((1, ts, D), lambda b, si, hi: (b, si, 0)),
            pl.BlockSpec((1, ts, D), lambda b, si, hi: (b, si, 0)),
            pl.BlockSpec((D, D), lambda b, si, hi: (0, 0)),
            pl.BlockSpec((1, D), lambda b, si, hi: (0, 0)),
            pl.BlockSpec((D, th), lambda b, si, hi: (0, hi)),
            pl.BlockSpec((D, th), lambda b, si, hi: (0, hi)),
            pl.BlockSpec((th, D), lambda b, si, hi: (hi, 0)),
        ],
        out_specs=pl.BlockSpec((1, ts, D), lambda b, si, hi: (b, si, 0)),
        out_shape=jax.ShapeDtypeStruct((B, S, D), x.dtype),
        scratch_shapes=[
            pltpu.VMEM((ts, D), jnp.float32),    # h (residual stream)
            pltpu.VMEM((ts, D), bf16),           # normalized h
            pltpu.VMEM((ts, D), jnp.float32),    # FFN accumulator
        ],
        compiler_params=cparams(("parallel", "parallel", "arbitrary")),
    )(x, av, wo, fnw, w1, w3, w2)

    return out


# ---------------------------------------------------------------------------
# Pure-JAX reference (f32) for correctness check
# ---------------------------------------------------------------------------
def reference_block(x, params, *, n_heads):
    B, S, D = x.shape
    hd = D // n_heads
    cos = params["rope_cos"].astype(jnp.float32)
    sin = params["rope_sin"].astype(jnp.float32)

    def rms(v, w):
        vf = v.astype(jnp.float32)
        return vf * jax.lax.rsqrt(jnp.mean(vf * vf, -1, keepdims=True) + EPS) * w

    def rope(t):  # (B, S, nh, hd)
        t1, t2 = t[..., : hd // 2], t[..., hd // 2:]
        rot = jnp.concatenate([-t2, t1], axis=-1)
        return t * cos[None, :, None, :] + rot * sin[None, :, None, :]

    xn = rms(x, params["attn_norm_w"][0])
    q = (xn @ params["wq"]).reshape(B, S, n_heads, hd)
    k = (xn @ params["wk"]).reshape(B, S, n_heads, hd)
    v = (xn @ params["wv"]).reshape(B, S, n_heads, hd)
    q, k = rope(q), rope(k)

    s = jnp.einsum("bqhd,bkhd->bhqk", q, k) / jnp.sqrt(jnp.float32(hd))
    causal = jnp.tril(jnp.ones((S, S), bool))
    s = jnp.where(causal[None, None], s, MASK_VAL)
    p = jax.nn.softmax(s, axis=-1)
    av = jnp.einsum("bhqk,bkhd->bqhd", p, v).reshape(B, S, D)
    h = x + av @ params["wo"]

    hn = rms(h, params["ffn_norm_w"][0])
    a = hn @ params["w1"]
    b = hn @ params["w3"]
    return h + (jax.nn.silu(a) * b) @ params["w2"]


def make_params(key, d_model, n_heads, ffn_hidden, seq_len):
    hd = d_model // n_heads
    ks = jax.random.split(key, 7)
    scale = 0.02
    params = {
        "wq": scale * jax.random.normal(ks[0], (d_model, d_model), jnp.float32),
        "wk": scale * jax.random.normal(ks[1], (d_model, d_model), jnp.float32),
        "wv": scale * jax.random.normal(ks[2], (d_model, d_model), jnp.float32),
        "wo": scale * jax.random.normal(ks[3], (d_model, d_model), jnp.float32),
        "w1": scale * jax.random.normal(ks[4], (d_model, ffn_hidden), jnp.float32),
        "w2": scale * jax.random.normal(ks[5], (ffn_hidden, d_model), jnp.float32),
        "w3": scale * jax.random.normal(ks[6], (d_model, ffn_hidden), jnp.float32),
        "attn_norm_w": jnp.ones((1, d_model), jnp.float32),
        "ffn_norm_w": jnp.ones((1, d_model), jnp.float32),
    }
    # RoPE tables (rotate-half convention)
    inv_freq = 1.0 / (ROPE_THETA ** (jnp.arange(0, hd, 2, dtype=jnp.float32) / hd))
    t = jnp.arange(seq_len, dtype=jnp.float32)
    freqs = jnp.outer(t, inv_freq)                      # (S, hd/2)
    emb = jnp.concatenate([freqs, freqs], axis=-1)      # (S, hd)
    params["rope_cos"] = jnp.cos(emb)
    params["rope_sin"] = jnp.sin(emb)
    return params


if __name__ == "__main__":
    # Small but tile-exercising shapes: 2 query/KV tiles, 2 H tiles, hd = 128.
    B, S, D = 2, 256, 256
    n_heads = 2
    ffn_hidden = 512

    key = jax.random.PRNGKey(0)
    kx, kp = jax.random.split(key)
    x = jax.random.normal(kx, (B, S, D), jnp.float32)
    params = make_params(kp, D, n_heads, ffn_hidden, S)

    out = jax.block_until_ready(transformer_block(x, params, n_heads=n_heads))
    ref = reference_block(x, params, n_heads=n_heads)

    assert out.shape == (B, S, D)
    max_err = jnp.max(jnp.abs(out - ref))
    assert jnp.allclose(out, ref, atol=2e-2, rtol=2e-2), f"max abs err {max_err}"

    print("KERNEL_OK")
</pallas_src>

<mosaic_0001>
module attributes {stable_mosaic.version = 11 : i64} {
  func.func @qkv_proj_kernel(%arg0: i32, %arg1: i32, %arg2: i32, %arg3: memref<1x128x256xf32, #tpu.memory_space<vmem>>, %arg4: memref<1x256xf32, #tpu.memory_space<vmem>>, %arg5: memref<128x128xf32, #tpu.memory_space<vmem>>, %arg6: memref<128x128xf32, #tpu.memory_space<vmem>>, %arg7: memref<256x128xbf16, #tpu.memory_space<vmem>>, %arg8: memref<256x128xbf16, #tpu.memory_space<vmem>>, %arg9: memref<256x128xbf16, #tpu.memory_space<vmem>>, %arg10: memref<1x128x128xbf16, #tpu.memory_space<vmem>>, %arg11: memref<1x128x128xbf16, #tpu.memory_space<vmem>>, %arg12: memref<1x128x128xbf16, #tpu.memory_space<vmem>>, %arg13: memref<128x256xbf16, #tpu.memory_space<vmem>>) attributes {dimension_semantics = [#tpu.dimension_semantics<parallel>, #tpu.dimension_semantics<parallel>, #tpu.dimension_semantics<arbitrary>], iteration_bounds = array<i64: 2, 2, 2>, scalar_prefetch = 0 : i64, scratch_operands = 1 : i64, tpu.core_type = #tpu.core_type<tc>, window_params = [{transform_indices = @transform_0, window_bounds = array<i64: 1, 128, 256>}, {pipeline_mode = #tpu.pipeline_mode<synchronous>, transform_indices = @transform_1, window_bounds = array<i64: 1, 256>}, {transform_indices = @transform_2, window_bounds = array<i64: 128, 128>}, {transform_indices = @transform_3, window_bounds = array<i64: 128, 128>}, {transform_indices = @transform_4, window_bounds = array<i64: 256, 128>}, {transform_indices = @transform_5, window_bounds = array<i64: 256, 128>}, {transform_indices = @transform_6, window_bounds = array<i64: 256, 128>}, {transform_indices = @transform_7, window_bounds = array<i64: 1, 128, 128>}, {transform_indices = @transform_8, window_bounds = array<i64: 1, 128, 128>}, {transform_indices = @transform_9, window_bounds = array<i64: 1, 128, 128>}]} {
    %c0_i32 = arith.constant 0 : i32
    %0 = arith.cmpi eq, %arg2, %c0_i32 : i32
    %1 = arith.extui %0 : i1 to i32
    %c0_i32_0 = arith.constant 0 : i32
    %2 = arith.cmpi ne, %1, %c0_i32_0 : i32
    scf.if %2 {
      %c0_25 = arith.constant 0 : index
      %c0_26 = arith.constant 0 : index
      %c0_27 = arith.constant 0 : index
      %34 = vector.load %arg3[%c0_25, %c0_26, %c0_27] : memref<1x128x256xf32, #tpu.memory_space<vmem>>, vector<1x128x256xf32>
      %35 = vector.shape_cast %34 : vector<1x128x256xf32> to vector<128x256xf32>
      %36 = arith.mulf %35, %35 : vector<128x256xf32>
      %cst_28 = arith.constant dense<0.000000e+00> : vector<128xf32>
      %37 = vector.multi_reduction <add>, %36, %cst_28 [1] : vector<128x256xf32> to vector<128xf32>
      %38 = vector.shape_cast %37 : vector<128xf32> to vector<128x1xf32>
      %cst_29 = arith.constant 2.560000e+02 : f32
      %39 = vector.broadcast %cst_29 : f32 to vector<128x1xf32>
      %40 = arith.divf %38, %39 : vector<128x1xf32>
      %cst_30 = arith.constant 9.99999974E-6 : f32
      %41 = vector.broadcast %cst_30 : f32 to vector<128x1xf32>
      %42 = arith.addf %40, %41 : vector<128x1xf32>
      %43 = math.rsqrt %42 : vector<128x1xf32>
      %44 = vector.broadcast %43 : vector<128x1xf32> to vector<128x256xf32>
      %45 = arith.mulf %35, %44 : vector<128x256xf32>
      %c0_31 = arith.constant 0 : index
      %c0_32 = arith.constant 0 : index
      %46 = vector.load %arg4[%c0_31, %c0_32] : memref<1x256xf32, #tpu.memory_space<vmem>>, vector<1x256xf32>
      %47 = vector.shape_cast %46 : vector<1x256xf32> to vector<256xf32>
      %48 = vector.shape_cast %47 : vector<256xf32> to vector<1x256xf32>
      %49 = vector.broadcast %48 : vector<1x256xf32> to vector<128x256xf32>
      %50 = arith.mulf %45, %49 : vector<128x256xf32>
      %51 = arith.truncf %50 : vector<128x256xf32> to vector<128x256xbf16>
      %c0_33 = arith.constant 0 : index
      %c0_34 = arith.constant 0 : index
      %52 = vector.load %arg13[%c0_33, %c0_34] : memref<128x256xbf16, #tpu.memory_space<vmem>>, vector<128x256xbf16>
      tpu.vector_store %arg13[%c0_33, %c0_34], %51 {strides = array<i32>} : memref<128x256xbf16, #tpu.memory_space<vmem>>, vector<128x256xbf16>,
    } else {
    }
    %c0 = arith.constant 0 : index
    %c0_1 = arith.constant 0 : index
    %3 = vector.load %arg13[%c0, %c0_1] : memref<128x256xbf16, #tpu.memory_space<vmem>>, vector<128x256xbf16>
    %c0_2 = arith.constant 0 : index
    %c0_3 = arith.constant 0 : index
    %4 = vector.load %arg5[%c0_2, %c0_3] : memref<128x128xf32, #tpu.memory_space<vmem>>, vector<128x128xf32>
    %c0_4 = arith.constant 0 : index
    %c0_5 = arith.constant 0 : index
    %5 = vector.load %arg6[%c0_4, %c0_5] : memref<128x128xf32, #tpu.memory_space<vmem>>, vector<128x128xf32>
    %c0_6 = arith.constant 0 : index
    %c0_7 = arith.constant 0 : index
    %6 = vector.load %arg7[%c0_6, %c0_7] : memref<256x128xbf16, #tpu.memory_space<vmem>>, vector<256x128xbf16>
    %cst = arith.constant dense<0.000000e+00> : vector<128x128xf32>
    %7 = tpu.matmul %3, %6, %cst {dimension_numbers = #tpu.dot_dimension_numbers<[1], [0], [0], [1], [0, 0, 1, 1], [], []>} : vector<128x256xbf16>, vector<256x128xbf16>, vector<128x128xf32> -> vector<128x128xf32>
    %c0_8 = arith.constant 0 : index
    %c0_9 = arith.constant 0 : index
    %8 = vector.load %arg8[%c0_8, %c0_9] : memref<256x128xbf16, #tpu.memory_space<vmem>>, vector<256x128xbf16>
    %cst_10 = arith.constant dense<0.000000e+00> : vector<128x128xf32>
    %9 = tpu.matmul %3, %8, %cst_10 {dimension_numbers = #tpu.dot_dimension_numbers<[1], [0], [0], [1], [0, 0, 1, 1], [], []>} : vector<128x256xbf16>, vector<256x128xbf16>, vector<128x128xf32> -> vector<128x128xf32>
    %10 = arith.mulf %7, %4 : vector<128x128xf32>
    %c64_i32 = arith.constant 64 : i32
    %11 = tpu.dynamic_rotate %7 by %c64_i32 dim 1 : vector<128x128xf32>, i32 -> vector<128x128xf32>
    %12 = arith.mulf %11, %5 : vector<128x128xf32>
    %13 = arith.addf %10, %12 : vector<128x128xf32>
    %cst_11 = arith.constant 0.0883883461 : f32
    %14 = vector.broadcast %cst_11 : f32 to vector<128x128xf32>
    %15 = arith.mulf %13, %14 : vector<128x128xf32>
    %16 = arith.truncf %15 : vector<128x128xf32> to vector<128x128xbf16>
    %c0_12 = arith.constant 0 : index
    %c0_13 = arith.constant 0 : index
    %c0_14 = arith.constant 0 : index
    %17 = vector.load %arg10[%c0_12, %c0_13, %c0_14] : memref<1x128x128xbf16, #tpu.memory_space<vmem>>, vector<1x128x128xbf16>
    %18 = vector.shape_cast %17 : vector<1x128x128xbf16> to vector<128x128xbf16>
    %19 = vector.shape_cast %16 : vector<128x128xbf16> to vector<1x128x128xbf16>
    tpu.vector_store %arg10[%c0_12, %c0_13, %c0_14], %19 {strides = array<i32>} : memref<1x128x128xbf16, #tpu.memory_space<vmem>>, vector<1x128x128xbf16>,
    %20 = arith.mulf %9, %4 : vector<128x128xf32>
    %c64_i32_15 = arith.constant 64 : i32
    %21 = tpu.dynamic_rotate %9 by %c64_i32_15 dim 1 : vector<128x128xf32>, i32 -> vector<128x128xf32>
    %22 = arith.mulf %21, %5 : vector<128x128xf32>
    %23 = arith.addf %20, %22 : vector<128x128xf32>
    %24 = arith.truncf %23 : vector<128x128xf32> to vector<128x128xbf16>
    %c0_16 = arith.constant 0 : index
    %c0_17 = arith.constant 0 : index
    %c0_18 = arith.constant 0 : index
    %25 = vector.load %arg11[%c0_16, %c0_17, %c0_18] : memref<1x128x128xbf16, #tpu.memory_space<vmem>>, vector<1x128x128xbf16>
    %26 = vector.shape_cast %25 : vector<1x128x128xbf16> to vector<128x128xbf16>
    %27 = vector.shape_cast %24 : vector<128x128xbf16> to vector<1x128x128xbf16>
    tpu.vector_store %arg11[%c0_16, %c0_17, %c0_18], %27 {strides = array<i32>} : memref<1x128x128xbf16, #tpu.memory_space<vmem>>, vector<1x128x128xbf16>,
    %c0_19 = arith.constant 0 : index
    %c0_20 = arith.constant 0 : index
    %28 = vector.load %arg9[%c0_19, %c0_20] : memref<256x128xbf16, #tpu.memory_space<vmem>>, vector<256x128xbf16>
    %cst_21 = arith.constant dense<0.000000e+00> : vector<128x128xf32>
    %29 = tpu.matmul %3, %28, %cst_21 {dimension_numbers = #tpu.dot_dimension_numbers<[1], [0], [0], [1], [0, 0, 1, 1], [], []>} : vector<128x256xbf16>, vector<256x128xbf16>, vector<128x128xf32> -> vector<128x128xf32>
    %30 = arith.truncf %29 : vector<128x128xf32> to vector<128x128xbf16>
    %c0_22 = arith.constant 0 : index
    %c0_23 = arith.constant 0 : index
    %c0_24 = arith.constant 0 : index
    %31 = vector.load %arg12[%c0_22, %c0_23, %c0_24] : memref<1x128x128xbf16, #tpu.memory_space<vmem>>, vector<1x128x128xbf16>
    %32 = vector.shape_cast %31 : vector<1x128x128xbf16> to vector<128x128xbf16>
    %33 = vector.shape_cast %30 : vector<128x128xbf16> to vector<1x128x128xbf16>
    tpu.vector_store %arg12[%c0_22, %c0_23, %c0_24], %33 {strides = array<i32>} : memref<1x128x128xbf16, #tpu.memory_space<vmem>>, vector<1x128x128xbf16>,
    return
  }
  func.func @transform_0(%arg0: i32, %arg1: i32, %arg2: i32) -> (i32, i32, i32) {
    %c0_i32 = arith.constant 0 : i32
    %c0_i32_0 = arith.constant 0 : i32
    return %arg0, %arg1, %c0_i32 : i32, i32, i32
  }
  func.func @transform_1(%arg0: i32, %arg1: i32, %arg2: i32) -> (i32, i32) {
    %c0_i32 = arith.constant 0 : i32
    %c0_i32_0 = arith.constant 0 : i32
    %c0_i32_1 = arith.constant 0 : i32
    return %c0_i32, %c0_i32_0 : i32, i32
  }
  func.func @transform_2(%arg0: i32, %arg1: i32, %arg2: i32) -> (i32, i32) {
    %c0_i32 = arith.constant 0 : i32
    %c0_i32_0 = arith.constant 0 : i32
    return %arg1, %c0_i32 : i32, i32
  }
  func.func @transform_3(%arg0: i32, %arg1: i32, %arg2: i32) -> (i32, i32) {
    %c0_i32 = arith.constant 0 : i32
    %c0_i32_0 = arith.constant 0 : i32
    return %arg1, %c0_i32 : i32, i32
  }
  func.func @transform_4(%arg0: i32, %arg1: i32, %arg2: i32) -> (i32, i32) {
    %c0_i32 = arith.constant 0 : i32
    %c0_i32_0 = arith.constant 0 : i32
    return %c0_i32, %arg2 : i32, i32
  }
  func.func @transform_5(%arg0: i32, %arg1: i32, %arg2: i32) -> (i32, i32) {
    %c0_i32 = arith.constant 0 : i32
    %c0_i32_0 = arith.constant 0 : i32
    return %c0_i32, %arg2 : i32, i32
  }
  func.func @transform_6(%arg0: i32, %arg1: i32, %arg2: i32) -> (i32, i32) {
    %c0_i32 = arith.constant 0 : i32
    %c0_i32_0 = arith.constant 0 : i32
    return %c0_i32, %arg2 : i32, i32
  }
  func.func @transform_7(%arg0: i32, %arg1: i32, %arg2: i32) -> (i32, i32, i32) {
    %c0_i32 = arith.constant 0 : i32
    return %arg0, %arg1, %arg2 : i32, i32, i32
  }
  func.func @transform_8(%arg0: i32, %arg1: i32, %arg2: i32) -> (i32, i32, i32) {
    %c0_i32 = arith.constant 0 : i32
    return %arg0, %arg1, %arg2 : i32, i32, i32
  }
  func.func @transform_9(%arg0: i32, %arg1: i32, %arg2: i32) -> (i32, i32, i32) {
    %c0_i32 = arith.constant 0 : i32
    return %arg0, %arg1, %arg2 : i32, i32, i32
  }
}

</mosaic_0001>

<llo_original>
// kernel: tpu_custom_call.1
$region0: #{tpu_custom_call.1}
  #allocation0 [shape = 'u32[]', space=smem, size = 0x4, offset = 0x4, fixed_abs, tag = 'smem constant byte address 0x4 - core index']
  #allocation1 [shape = 'u32[144,128]{1,0:T(1,128)}', space=vmem, size = 0x12000, scoped, tag = 'internal scratch']
  #allocation2 [shape = 'bf16[128,256]{1,0:T(16,128)(2,1)}', space=vmem, size = 0x10000, scoped, tag = 'scratch operand']
  %s0 = inlined_call_operand.hbm [shape: f32[2,256,256], index: 0, kind: input, shape index: {}]
  %s1 = inlined_call_operand.vmem [shape: f32[1,256], index: 1, kind: input, shape index: {}]
  %s2 = inlined_call_operand.hbm [shape: f32[256,128], index: 2, kind: input, shape index: {}]
  %s3 = inlined_call_operand.hbm [shape: f32[256,128], index: 3, kind: input, shape index: {}]
  %s4 = inlined_call_operand.hbm [shape: bf16[256,256], index: 4, kind: input, shape index: {}]
  %s5 = inlined_call_operand.hbm [shape: bf16[256,256], index: 5, kind: input, shape index: {}]
  %s6 = inlined_call_operand.hbm [shape: bf16[256,256], index: 6, kind: input, shape index: {}]
  %s7 = inlined_call_operand.hbm [shape: bf16[2,256,256], index: 7, kind: output, shape index: {0}]
  %s8 = inlined_call_operand.hbm [shape: bf16[2,256,256], index: 8, kind: output, shape index: {1}]
  %s9 = inlined_call_operand.hbm [shape: bf16[2,256,256], index: 9, kind: output, shape index: {2}]
  %10 = xla_tuple %s7, %s8, %s9
  %s11 = sld [smem:[#allocation0]]
  $region105: #{tpu_custom_call.1} parent=0
    _
  %s13 = ssub.s32 1, %s11
  %s14 = scalar_select 0, %s13, %s11
  $region1: #{tpu_custom_call.1} parent=0
    #allocation3 [shape = 'u8[262144]{0}', space=vmem, size = 0x40000, scoped, tag = 'input window, operand 0']
    #allocation4 [shape = 's32[2]{0}', space=sflag, size = 0x8, scoped, tag = 'scoped memory for tpu_custom_call.1']
    #allocation5 [shape = 's32[2]{0}', space=sflag, size = 0x8, scoped, tag = 'scoped memory for tpu_custom_call.1']
    #allocation6 [shape = 'u8[131072]{0}', space=vmem, size = 0x20000, scoped, tag = 'input window, operand 2']
    #allocation7 [shape = 's32[2]{0}', space=sflag, size = 0x8, scoped, tag = 'scoped memory for tpu_custom_call.1']
    #allocation8 [shape = 'u8[131072]{0}', space=vmem, size = 0x20000, scoped, tag = 'input window, operand 3']
    #allocation9 [shape = 'u8[131072]{0}', space=vmem, size = 0x20000, scoped, tag = 'input window, operand 4']
    #allocation10 [shape = 's32[2]{0}', space=sflag, size = 0x8, scoped, tag = 'scoped memory for tpu_custom_call.1']
    #allocation11 [shape = 'u8[131072]{0}', space=vmem, size = 0x20000, scoped, tag = 'input window, operand 5']
    #allocation12 [shape = 'u8[131072]{0}', space=vmem, size = 0x20000, scoped, tag = 'input window, operand 6']
    #allocation13 [shape = 's32[2]{0}', space=sflag, size = 0x8, scoped, tag = 'scoped memory for tpu_custom_call.1']
    #allocation14 [shape = 'u8[65536]{0}', space=vmem, size = 0x10000, scoped, tag = 'output window, operand 0']
    #allocation15 [shape = 'u8[65536]{0}', space=vmem, size = 0x10000, scoped, tag = 'output window, operand 1']
    #allocation16 [shape = 's32[2]{0}', space=sflag, size = 0x8, scoped, tag = 'scoped memory for tpu_custom_call.1']
    #allocation17 [shape = 'u8[65536]{0}', space=vmem, size = 0x10000, scoped, tag = 'output window, operand 2']
    %15 = vsyncpa [#allocation4], 0
    %s16 = scalar_lea.sflag [#allocation4], 1
    %17 = vsyncpa %s16, 0
    %18 = vsyncpa [#allocation7], 0
    %s19 = scalar_lea.sflag [#allocation7], 1
    %20 = vsyncpa %s19, 0
    %21 = vsyncpa [#allocation10], 0
    %s22 = scalar_lea.sflag [#allocation10], 1
    %23 = vsyncpa %s22, 0
    %24 = vsyncpa [#allocation13], 0
    %s25 = scalar_lea.sflag [#allocation13], 1
    %26 = vsyncpa %s25, 0
    %27 = vsyncpa [#allocation5], 0
    %s28 = scalar_lea.sflag [#allocation5], 1
    %29 = vsyncpa %s28, 0
    %30 = vsyncpa [#allocation16], 0
    %s31 = scalar_lea.sflag [#allocation16], 1
    %32 = vsyncpa %s31, 0
    loop: start=0, step=1, limit=10
    $region2: #{tpu_custom_call.1} parent=1 // loop_pre_header
      _
    $region3: #{tpu_custom_call.1} parent=1 // loop_header
      %s34 = sphi 0, %s38
      %p35 = scmp.ge.s32.totalorder %s34, 10
      %s41 = sphi 0, %s60
      %s42 = sphi 0, %s56
      %s43 = sphi 0, %s52
      %s44 = sphi 0, %s41
      %s45 = sphi 0, %s42
      %s46 = sphi 0, %s43
      %s47 = sphi 0, %s44
      %s48 = sphi 0, %s45
      %s49 = sphi 0, %s46
      %s65 = sphi 0, %s67
      %s68 = sphi 0, %s65
      %s69 = sphi 0, %s68
      %s85 = sphi 0, %s69
      %s89 = sphi 0, %s89
      %s91 = sphi 0, %s89
      %s92 = sphi 0, %s91
      %s106 = sphi 0, %s92
      %s112 = sphi 0, %s114
      %s115 = sphi 0, %s112
      %s116 = sphi 0, %s115
      %s132 = sphi 0, %s116
      %s138 = sphi 0, %s140
      %s141 = sphi 0, %s138
      %s142 = sphi 0, %s141
      %s158 = sphi 0, %s142
      %s164 = sphi 0, %s166
      %s167 = sphi 0, %s164
      %s168 = sphi 0, %s167
      %s184 = sphi 0, %s168
      %s190 = sphi 0, %s192
      %s193 = sphi 0, %s190
      %s194 = sphi 0, %s193
      %s210 = sphi 0, %s194
      %s216 = sphi 0, %s218
      %s219 = sphi 0, %s216
      %s220 = sphi 0, %s219
      %s236 = sphi 0, %s220
      %s246 = sphi 0, %s248
      %s249 = sphi 0, %s246
      %s250 = sphi 0, %s249
      %s266 = sphi 0, %s250
      %s276 = sphi 0, %s278
      %s279 = sphi 0, %s276
      %s280 = sphi 0, %s279
      %s296 = sphi 0, %s280
      %s306 = sphi 0, %s308
      %s309 = sphi 0, %s306
      %s310 = sphi 0, %s309
      %s326 = sphi 0, %s310
    $region4: #{tpu_custom_call.1} parent=1 // loop_header_branch
      %37 = sbr.rel (%p35) target = $region8
    $region5: #{tpu_custom_call.1} parent=1 // loop_body
      %s39 = ssub.s32 %s34, 1
      %s40 = ssub.s32 %s34, 2
      %s50 = sadd.s32 1, %s43
      %p51 = scmp.ge.s32.totalorder %s50, 2
      %s52 = scalar_select %p51, 0, %s50
      %s53 = sadd.s32 1, %s42
      %s54 = scalar_select %p51, %s53, %s42
      %p55 = scmp.ge.s32.totalorder %s54, 2
      %s56 = scalar_select %p55, 0, %s54
      %s57 = sadd.s32 1, %s41
      %s58 = scalar_select %p55, %s57, %s41
      %p59 = scmp.ge.s32.totalorder %s58, 2
      %s60 = scalar_select %p59, 0, %s58
      %s61 = ssub.s32 %s41, %s60
      %s62 = ssub.s32 %s42, %s56
      %s63 = sor.u32 %s61, %s62
      %p64 = scmp.eq.s32.totalorder %s63, 0
      %s66 = sadd.s32 %s65, 1
      %s67 = scalar_select %p64, %s65, %s66
      %p70 = pneg %p64
      %p71 = scmp.eq.s32.totalorder %s34, 7
      %p72 = por %p70, %p71
      %p73 = scmp.ne.s32.totalorder %s65, %s68
      %p74 = scmp.eq.s32.totalorder %s34, 0
      %p75 = por %p73, %p74
      %p76 = scmp.ne.s32.totalorder %s65, %s68
      %p77 = scmp.eq.s32.totalorder %s39, 7
      %p78 = por %p76, %p77
      %p79 = scmp.ne.s32.totalorder %s68, %s69
      %p80 = scmp.eq.s32.totalorder %s39, 0
      %p81 = por %p79, %p80
      %p82 = scmp.ne.s32.totalorder %s68, %s69
      %p83 = scmp.eq.s32.totalorder %s40, 7
      %p84 = por %p82, %p83
      %p86 = scmp.ne.s32.totalorder %s69, %s85
      %p87 = scmp.eq.s32.totalorder %s40, 0
      %p88 = por %p86, %p87
      %s90 = sadd.s32 %s89, 1
      %p93 = scmp.eq.s32.totalorder %s34, 7
      %p94 = scmp.ne.s32.totalorder %s89, %s91
      %p95 = scmp.eq.s32.totalorder %s34, 0
      %p96 = por %p94, %p95
      %p97 = scmp.ne.s32.totalorder %s89, %s91
      %p98 = scmp.eq.s32.totalorder %s39, 7
      %p99 = por %p97, %p98
      %p100 = scmp.ne.s32.totalorder %s91, %s92
      %p101 = scmp.eq.s32.totalorder %s39, 0
      %p102 = por %p100, %p101
      %p103 = scmp.ne.s32.totalorder %s91, %s92
      %p104 = scmp.eq.s32.totalorder %s40, 7
      %p105 = por %p103, %p104
      %p107 = scmp.ne.s32.totalorder %s92, %s106
      %p108 = scmp.eq.s32.totalorder %s40, 0
      %p109 = por %p107, %p108
      %s110 = ssub.s32 %s42, %s56
      %p111 = scmp.eq.s32.totalorder %s110, 0
      %s113 = sadd.s32 %s112, 1
      %s114 = scalar_select %p111, %s112, %s113
      %p117 = pneg %p111
      %p118 = scmp.eq.s32.totalorder %s34, 7
      %p119 = por %p117, %p118
      %p120 = scmp.ne.s32.totalorder %s112, %s115
      %p121 = scmp.eq.s32.totalorder %s34, 0
      %p122 = por %p120, %p121
      %p123 = scmp.ne.s32.totalorder %s112, %s115
      %p124 = scmp.eq.s32.totalorder %s39, 7
      %p125 = por %p123, %p124
      %p126 = scmp.ne.s32.totalorder %s115, %s116
      %p127 = scmp.eq.s32.totalorder %s39, 0
      %p128 = por %p126, %p127
      %p129 = scmp.ne.s32.totalorder %s115, %s116
      %p130 = scmp.eq.s32.totalorder %s40, 7
      %p131 = por %p129, %p130
      %p133 = scmp.ne.s32.totalorder %s116, %s132
      %p134 = scmp.eq.s32.totalorder %s40, 0
      %p135 = por %p133, %p134
      %s136 = ssub.s32 %s42, %s56
      %p137 = scmp.eq.s32.totalorder %s136, 0
      %s139 = sadd.s32 %s138, 1
      %s140 = scalar_select %p137, %s138, %s139
      %p143 = pneg %p137
      %p144 = scmp.eq.s32.totalorder %s34, 7
      %p145 = por %p143, %p144
      %p146 = scmp.ne.s32.totalorder %s138, %s141
      %p147 = scmp.eq.s32.totalorder %s34, 0
      %p148 = por %p146, %p147
      %p149 = scmp.ne.s32.totalorder %s138, %s141
      %p150 = scmp.eq.s32.totalorder %s39, 7
      %p151 = por %p149, %p150
      %p152 = scmp.ne.s32.totalorder %s141, %s142
      %p153 = scmp.eq.s32.totalorder %s39, 0
      %p154 = por %p152, %p153
      %p155 = scmp.ne.s32.totalorder %s141, %s142
      %p156 = scmp.eq.s32.totalorder %s40, 7
      %p157 = por %p155, %p156
      %p159 = scmp.ne.s32.totalorder %s142, %s158
      %p160 = scmp.eq.s32.totalorder %s40, 0
      %p161 = por %p159, %p160
      %s162 = ssub.s32 %s43, %s52
      %p163 = scmp.eq.s32.totalorder %s162, 0
      %s165 = sadd.s32 %s164, 1
      %s166 = scalar_select %p163, %s164, %s165
      %p169 = pneg %p163
      %p170 = scmp.eq.s32.totalorder %s34, 7
      %p171 = por %p169, %p170
      %p172 = scmp.ne.s32.totalorder %s164, %s167
      %p173 = scmp.eq.s32.totalorder %s34, 0
      %p174 = por %p172, %p173
      %p175 = scmp.ne.s32.totalorder %s164, %s167
      %p176 = scmp.eq.s32.totalorder %s39, 7
      %p177 = por %p175, %p176
      %p178 = scmp.ne.s32.totalorder %s167, %s168
      %p179 = scmp.eq.s32.totalorder %s39, 0
      %p180 = por %p178, %p179
      %p181 = scmp.ne.s32.totalorder %s167, %s168
      %p182 = scmp.eq.s32.totalorder %s40, 7
      %p183 = por %p181, %p182
      %p185 = scmp.ne.s32.totalorder %s168, %s184
      %p186 = scmp.eq.s32.totalorder %s40, 0
      %p187 = por %p185, %p186
      %s188 = ssub.s32 %s43, %s52
      %p189 = scmp.eq.s32.totalorder %s188, 0
      %s191 = sadd.s32 %s190, 1
      %s192 = scalar_select %p189, %s190, %s191
      %p195 = pneg %p189
      %p196 = scmp.eq.s32.totalorder %s34, 7
      %p197 = por %p195, %p196
      %p198 = scmp.ne.s32.totalorder %s190, %s193
      %p199 = scmp.eq.s32.totalorder %s34, 0
      %p200 = por %p198, %p199
      %p201 = scmp.ne.s32.totalorder %s190, %s193
      %p202 = scmp.eq.s32.totalorder %s39, 7
      %p203 = por %p201, %p202
      %p204 = scmp.ne.s32.totalorder %s193, %s194
      %p205 = scmp.eq.s32.totalorder %s39, 0
      %p206 = por %p204, %p205
      %p207 = scmp.ne.s32.totalorder %s193, %s194
      %p208 = scmp.eq.s32.totalorder %s40, 7
      %p209 = por %p207, %p208
      %p211 = scmp.ne.s32.totalorder %s194, %s210
      %p212 = scmp.eq.s32.totalorder %s40, 0
      %p213 = por %p211, %p212
      %s214 = ssub.s32 %s43, %s52
      %p215 = scmp.eq.s32.totalorder %s214, 0
      %s217 = sadd.s32 %s216, 1
      %s218 = scalar_select %p215, %s216, %s217
      %p221 = pneg %p215
      %p222 = scmp.eq.s32.totalorder %s34, 7
      %p223 = por %p221, %p222
      %p224 = scmp.ne.s32.totalorder %s216, %s219
      %p225 = scmp.eq.s32.totalorder %s34, 0
      %p226 = por %p224, %p225
      %p227 = scmp.ne.s32.totalorder %s216, %s219
      %p228 = scmp.eq.s32.totalorder %s39, 7
      %p229 = por %p227, %p228
      %p230 = scmp.ne.s32.totalorder %s219, %s220
      %p231 = scmp.eq.s32.totalorder %s39, 0
      %p232 = por %p230, %p231
      %p233 = scmp.ne.s32.totalorder %s219, %s220
      %p234 = scmp.eq.s32.totalorder %s40, 7
      %p235 = por %p233, %p234
      %p237 = scmp.ne.s32.totalorder %s220, %s236
      %p238 = scmp.eq.s32.totalorder %s40, 0
      %p239 = por %p237, %p238
      %s240 = ssub.s32 %s41, %s60
      %s241 = ssub.s32 %s42, %s56
      %s242 = sor.u32 %s240, %s241
      %s243 = ssub.s32 %s43, %s52
      %s244 = sor.u32 %s242, %s243
      %p245 = scmp.eq.s32.totalorder %s244, 0
      %s247 = sadd.s32 %s246, 1
      %s248 = scalar_select %p245, %s246, %s247
      %p251 = pneg %p245
      %p252 = scmp.eq.s32.totalorder %s34, 7
      %p253 = por %p251, %p252
      %p254 = scmp.ne.s32.totalorder %s246, %s249
      %p255 = scmp.eq.s32.totalorder %s34, 0
      %p256 = por %p254, %p255
      %p257 = scmp.ne.s32.totalorder %s246, %s249
      %p258 = scmp.eq.s32.totalorder %s39, 7
      %p259 = por %p257, %p258
      %p260 = scmp.ne.s32.totalorder %s249, %s250
      %p261 = scmp.eq.s32.totalorder %s39, 0
      %p262 = por %p260, %p261
      %p263 = scmp.ne.s32.totalorder %s249, %s250
      %p264 = scmp.eq.s32.totalorder %s40, 7
      %p265 = por %p263, %p264
      %p267 = scmp.ne.s32.totalorder %s250, %s266
      %p268 = scmp.eq.s32.totalorder %s40, 0
      %p269 = por %p267, %p268
      %s270 = ssub.s32 %s41, %s60
      %s271 = ssub.s32 %s42, %s56
      %s272 = sor.u32 %s270, %s271
      %s273 = ssub.s32 %s43, %s52
      %s274 = sor.u32 %s272, %s273
      %p275 = scmp.eq.s32.totalorder %s274, 0
      %s277 = sadd.s32 %s276, 1
      %s278 = scalar_select %p275, %s276, %s277
      %p281 = pneg %p275
      %p282 = scmp.eq.s32.totalorder %s34, 7
      %p283 = por %p281, %p282
      %p284 = scmp.ne.s32.totalorder %s276, %s279
      %p285 = scmp.eq.s32.totalorder %s34, 0
      %p286 = por %p284, %p285
      %p287 = scmp.ne.s32.totalorder %s276, %s279
      %p288 = scmp.eq.s32.totalorder %s39, 7
      %p289 = por %p287, %p288
      %p290 = scmp.ne.s32.totalorder %s279, %s280
      %p291 = scmp.eq.s32.totalorder %s39, 0
      %p292 = por %p290, %p291
      %p293 = scmp.ne.s32.totalorder %s279, %s280
      %p294 = scmp.eq.s32.totalorder %s40, 7
      %p295 = por %p293, %p294
      %p297 = scmp.ne.s32.totalorder %s280, %s296
      %p298 = scmp.eq.s32.totalorder %s40, 0
      %p299 = por %p297, %p298
      %s300 = ssub.s32 %s41, %s60
      %s301 = ssub.s32 %s42, %s56
      %s302 = sor.u32 %s300, %s301
      %s303 = ssub.s32 %s43, %s52
      %s304 = sor.u32 %s302, %s303
      %p305 = scmp.eq.s32.totalorder %s304, 0
      %s307 = sadd.s32 %s306, 1
      %s308 = scalar_select %p305, %s306, %s307
      %p311 = pneg %p305
      %p312 = scmp.eq.s32.totalorder %s34, 7
      %p313 = por %p311, %p312
      %p314 = scmp.ne.s32.totalorder %s306, %s309
      %p315 = scmp.eq.s32.totalorder %s34, 0
      %p316 = por %p314, %p315
      %p317 = scmp.ne.s32.totalorder %s306, %s309
      %p318 = scmp.eq.s32.totalorder %s39, 7
      %p319 = por %p317, %p318
      %p320 = scmp.ne.s32.totalorder %s309, %s310
      %p321 = scmp.eq.s32.totalorder %s39, 0
      %p322 = por %p320, %p321
      %p323 = scmp.ne.s32.totalorder %s309, %s310
      %p324 = scmp.eq.s32.totalorder %s40, 7
      %p325 = por %p323, %p324
      %p327 = scmp.ne.s32.totalorder %s310, %s326
      %p328 = scmp.eq.s32.totalorder %s40, 0
      %p329 = por %p327, %p328
      %p330 = scmp.le.s32.totalorder 1, %s34
      %p331 = scmp.lt.s32.totalorder %s34, 9
      %p332 = pnand %p330, %p331
      %p333 = pneg %p332
      // Predicated region
      $region9: #{tpu_custom_call.1} parent=5 // pred_check
        _
      $region10: #{tpu_custom_call.1} parent=5 // pred_check_branch
        %335 = sbr.rel (%p332) target = $region12
      $region11: #{tpu_custom_call.1} parent=5 // pred_region
        %s336 = ssub.s32 %s34, 1
        // Predicated region
        $region13: #{tpu_custom_call.1} parent=11 // pred_check
          %p337 = pneg %p102
        $region14: #{tpu_custom_call.1} parent=11 // pred_check_branch
          %339 = sbr.rel (%p337) target = $region16
        $region15: #{tpu_custom_call.1} parent=11 // pred_region
          _
        $region16: #{tpu_custom_call.1} parent=11 // pred_fallthru
          _
      $region12: #{tpu_custom_call.1} parent=5 // pred_fallthru
        _
      %p340 = scmp.lt.s32.totalorder %s34, 8
      // Predicated region
      $region17: #{tpu_custom_call.1} parent=5 // pred_check
        %p341 = pneg %p340
      $region18: #{tpu_custom_call.1} parent=5 // pred_check_branch
        %343 = sbr.rel (%p341) target = $region20
      $region19: #{tpu_custom_call.1} parent=5 // pred_region
        // Predicated region
        $region21: #{tpu_custom_call.1} parent=19 // pred_check
          %p344 = pneg %p75
        $region22: #{tpu_custom_call.1} parent=19 // pred_check_branch
          %346 = sbr.rel (%p344) target = $region24
        $region23: #{tpu_custom_call.1} parent=19 // pred_region
          %s347 = sand.u32 %s65, 1
          %s348 = scalar_lea.sflag [#allocation4], %s347
          %s349 = sand.u32 %s65, 1
          %s350 = smul.addr %s349, 256
          %s351 = scalar_lea.vmem [#allocation3], %s350
          %s352 = smul.u32 16, %s42
          %s354 = ssub.s32 4096, 4096
          %355 = vsyncadd %s348, %s354
          %s356 = smul.addr %s352, 2
          %s357 = smul.addr %s41, 64
          %s358 = sadd.s32 %s356, %s357
          %s359 = smul.addr %s358, 128
          %s360 = scalar_lea.hbm %s0, %s359
          %s361 = sshll.u32 %s351, 4
          %s362 = int_to_ptr.vmem [resolvable:$true] %s361
          %367 = dma.hbm_to_vmem [thread:$0]  %s360, 4096, %s362, %s348, 256, 256, 16
        $region24: #{tpu_custom_call.1} parent=19 // pred_fallthru
          _
        // Predicated region
        $region25: #{tpu_custom_call.1} parent=19 // pred_check
          %p368 = pneg %p122
        $region26: #{tpu_custom_call.1} parent=19 // pred_check_branch
          %370 = sbr.rel (%p368) target = $region28
        $region27: #{tpu_custom_call.1} parent=19 // pred_region
          %s371 = sand.u32 %s34, 1
          %s372 = scalar_lea.sflag [#allocation7], %s371
          %s373 = sand.u32 %s112, 1
          %s374 = smul.addr %s373, 128
          %s375 = scalar_lea.vmem [#allocation6], %s374
          %s376 = smul.u32 16, %s42
          %s378 = ssub.s32 2048, 2048
          %379 = vsyncadd %s372, %s378
          %s380 = smul.addr %s376, 128
          %s381 = scalar_lea.hbm %s2, %s380
          %s382 = sshll.u32 %s375, 4
          %s383 = int_to_ptr.vmem [resolvable:$true] %s382
          %388 = dma.hbm_to_vmem [thread:$0]  %s381, 2048, %s383, %s372, 128, 128, 8
        $region28: #{tpu_custom_call.1} parent=19 // pred_fallthru
          _
        // Predicated region
        $region29: #{tpu_custom_call.1} parent=19 // pred_check
          %p389 = pneg %p148
        $region30: #{tpu_custom_call.1} parent=19 // pred_check_branch
          %391 = sbr.rel (%p389) target = $region32
        $region31: #{tpu_custom_call.1} parent=19 // pred_region
          %s392 = sand.u32 %s34, 1
          %s393 = scalar_lea.sflag [#allocation7], %s392
          %s394 = sand.u32 %s138, 1
          %s395 = smul.addr %s394, 128
          %s396 = scalar_lea.vmem [#allocation8], %s395
          %s397 = smul.u32 16, %s42
          %s399 = ssub.s32 2048, 2048
          %400 = vsyncadd %s393, %s399
          %s401 = smul.addr %s397, 128
          %s402 = scalar_lea.hbm %s3, %s401
          %s403 = sshll.u32 %s396, 4
          %s404 = int_to_ptr.vmem [resolvable:$true] %s403
          %409 = dma.hbm_to_vmem [thread:$0]  %s402, 2048, %s404, %s393, 128, 128, 8
        $region32: #{tpu_custom_call.1} parent=19 // pred_fallthru
          _
        // Predicated region
        $region33: #{tpu_custom_call.1} parent=19 // pred_check
          %p410 = pneg %p174
        $region34: #{tpu_custom_call.1} parent=19 // pred_check_branch
          %412 = sbr.rel (%p410) target = $region36
        $region35: #{tpu_custom_call.1} parent=19 // pred_region
          %s413 = sand.u32 %s34, 1
          %s414 = scalar_lea.sflag [#allocation10], %s413
          %s415 = sand.u32 %s164, 1
          %s416 = smul.addr %s415, 128
          %s417 = scalar_lea.vmem [#allocation9], %s416
          %s419 = ssub.s32 2048, 2048
          %420 = vsyncadd %s414, %s419
          %s421 = smul.addr %s43, 64
          %s422 = scalar_lea.hbm %s4, %s421
          %s423 = sshll.u32 %s417, 4
          %s424 = int_to_ptr.vmem [resolvable:$true] %s423
          %429 = dma.hbm_to_vmem [thread:$0]  %s422, 2048, %s424, %s414, 128, 64, 4
        $region36: #{tpu_custom_call.1} parent=19 // pred_fallthru
          _
        // Predicated region
        $region37: #{tpu_custom_call.1} parent=19 // pred_check
          %p430 = pneg %p200
        $region38: #{tpu_custom_call.1} parent=19 // pred_check_branch
          %432 = sbr.rel (%p430) target = $region40
        $region39: #{tpu_custom_call.1} parent=19 // pred_region
          %s433 = sand.u32 %s34, 1
          %s434 = scalar_lea.sflag [#allocation10], %s433
          %s435 = sand.u32 %s190, 1
          %s436 = smul.addr %s435, 128
          %s437 = scalar_lea.vmem [#allocation11], %s436
          %s439 = ssub.s32 2048, 2048
          %440 = vsyncadd %s434, %s439
          %s441 = smul.addr %s43, 64
          %s442 = scalar_lea.hbm %s5, %s441
          %s443 = sshll.u32 %s437, 4
          %s444 = int_to_ptr.vmem [resolvable:$true] %s443
          %449 = dma.hbm_to_vmem [thread:$0]  %s442, 2048, %s444, %s434, 128, 64, 4
        $region40: #{tpu_custom_call.1} parent=19 // pred_fallthru
          _
        // Predicated region
        $region41: #{tpu_custom_call.1} parent=19 // pred_check
          %p450 = pneg %p226
        $region42: #{tpu_custom_call.1} parent=19 // pred_check_branch
          %452 = sbr.rel (%p450) target = $region44
        $region43: #{tpu_custom_call.1} parent=19 // pred_region
          %s453 = sand.u32 %s216, 1
          %s454 = scalar_lea.sflag [#allocation13], %s453
          %s455 = sand.u32 %s216, 1
          %s456 = smul.addr %s455, 128
          %s457 = scalar_lea.vmem [#allocation12], %s456
          %s459 = ssub.s32 2048, 2048
          %460 = vsyncadd %s454, %s459
          %s461 = smul.addr %s43, 64
          %s462 = scalar_lea.hbm %s6, %s461
          %s463 = sshll.u32 %s457, 4
          %s464 = int_to_ptr.vmem [resolvable:$true] %s463
          %469 = dma.hbm_to_vmem [thread:$0]  %s462, 2048, %s464, %s454, 128, 64, 4
        $region44: #{tpu_custom_call.1} parent=19 // pred_fallthru
          _
      $region20: #{tpu_custom_call.1} parent=5 // pred_fallthru
        _
      %p470 = scmp.le.s32.totalorder 1, %s34
      %p471 = scmp.lt.s32.totalorder %s34, 9
      %p472 = pnand %p470, %p471
      %p473 = pneg %p472
      // Predicated region
      $region45: #{tpu_custom_call.1} parent=5 // pred_check
        _
      $region46: #{tpu_custom_call.1} parent=5 // pred_check_branch
        %475 = sbr.rel (%p472) target = $region48
      $region47: #{tpu_custom_call.1} parent=5 // pred_region
        %s476 = ssub.s32 %s34, 1
        %s477 = sand.u32 %s68, 1
        %s478 = scalar_lea.sflag [#allocation4], %s477
        %s479 = sand.u32 %s68, 1
        %s480 = smul.addr %s479, 256
        %s481 = scalar_lea.vmem [#allocation3], %s480
        // Predicated region
        $region49: #{tpu_custom_call.1} parent=47 // pred_check
          %p482 = pneg %p81
        $region50: #{tpu_custom_call.1} parent=47 // pred_check_branch
          %484 = sbr.rel (%p482) target = $region52
        $region51: #{tpu_custom_call.1} parent=47 // pred_region
          %485 = dma.done %s478, 4096
        $region52: #{tpu_custom_call.1} parent=47 // pred_fallthru
          _
        %s486 = sand.u32 %s39, 1
        %s487 = scalar_lea.sflag [#allocation7], %s486
        %s488 = sand.u32 %s115, 1
        %s489 = smul.addr %s488, 128
        %s490 = scalar_lea.vmem [#allocation6], %s489
        // Predicated region
        $region53: #{tpu_custom_call.1} parent=47 // pred_check
          %p491 = pneg %p128
        $region54: #{tpu_custom_call.1} parent=47 // pred_check_branch
          %493 = sbr.rel (%p491) target = $region56
        $region55: #{tpu_custom_call.1} parent=47 // pred_region
          %494 = dma.done %s487, 2048
        $region56: #{tpu_custom_call.1} parent=47 // pred_fallthru
          _
        %s495 = sand.u32 %s39, 1
        %s496 = scalar_lea.sflag [#allocation7], %s495
        %s497 = sand.u32 %s141, 1
        %s498 = smul.addr %s497, 128
        %s499 = scalar_lea.vmem [#allocation8], %s498
        // Predicated region
        $region57: #{tpu_custom_call.1} parent=47 // pred_check
          %p500 = pneg %p154
        $region58: #{tpu_custom_call.1} parent=47 // pred_check_branch
          %502 = sbr.rel (%p500) target = $region60
        $region59: #{tpu_custom_call.1} parent=47 // pred_region
          %503 = dma.done %s496, 2048
        $region60: #{tpu_custom_call.1} parent=47 // pred_fallthru
          _
        %s504 = sand.u32 %s39, 1
        %s505 = scalar_lea.sflag [#allocation10], %s504
        %s506 = sand.u32 %s167, 1
        %s507 = smul.addr %s506, 128
        %s508 = scalar_lea.vmem [#allocation9], %s507
        // Predicated region
        $region61: #{tpu_custom_call.1} parent=47 // pred_check
          %p509 = pneg %p180
        $region62: #{tpu_custom_call.1} parent=47 // pred_check_branch
          %511 = sbr.rel (%p509) target = $region64
        $region63: #{tpu_custom_call.1} parent=47 // pred_region
          %512 = dma.done %s505, 2048
        $region64: #{tpu_custom_call.1} parent=47 // pred_fallthru
          _
        %s513 = sand.u32 %s39, 1
        %s514 = scalar_lea.sflag [#allocation10], %s513
        %s515 = sand.u32 %s193, 1
        %s516 = smul.addr %s515, 128
        %s517 = scalar_lea.vmem [#allocation11], %s516
        // Predicated region
        $region65: #{tpu_custom_call.1} parent=47 // pred_check
          %p518 = pneg %p206
        $region66: #{tpu_custom_call.1} parent=47 // pred_check_branch
          %520 = sbr.rel (%p518) target = $region68
        $region67: #{tpu_custom_call.1} parent=47 // pred_region
          %521 = dma.done %s514, 2048
        $region68: #{tpu_custom_call.1} parent=47 // pred_fallthru
          _
        %s522 = sand.u32 %s219, 1
        %s523 = scalar_lea.sflag [#allocation13], %s522
        %s524 = sand.u32 %s219, 1
        %s525 = smul.addr %s524, 128
        %s526 = scalar_lea.vmem [#allocation12], %s525
        // Predicated region
        $region69: #{tpu_custom_call.1} parent=47 // pred_check
          %p527 = pneg %p232
        $region70: #{tpu_custom_call.1} parent=47 // pred_check_branch
          %529 = sbr.rel (%p527) target = $region72
        $region71: #{tpu_custom_call.1} parent=47 // pred_region
          %530 = dma.done %s523, 2048
        $region72: #{tpu_custom_call.1} parent=47 // pred_fallthru
          _
        %s531 = sand.u32 %s68, 1
        %s532 = scalar_lea.sflag [#allocation4], %s531
        %s533 = sand.u32 %s68, 1
        %s534 = smul.addr %s533, 256
        %s535 = scalar_lea.vmem [#allocation3], %s534
        %p536 = pneg %p81
        %p537 = pneg %p78
        %p538 = pneg %p102
        %p539 = pneg %p99
        %s540 = sand.u32 %s39, 1
        %s541 = scalar_lea.sflag [#allocation7], %s540
        %s542 = sand.u32 %s115, 1
        %s543 = smul.addr %s542, 128
        %s544 = scalar_lea.vmem [#allocation6], %s543
        %p545 = pneg %p128
        %p546 = pneg %p125
        %s547 = sand.u32 %s39, 1
        %s548 = scalar_lea.sflag [#allocation7], %s547
        %s549 = sand.u32 %s141, 1
        %s550 = smul.addr %s549, 128
        %s551 = scalar_lea.vmem [#allocation8], %s550
        %p552 = pneg %p154
        %p553 = pneg %p151
        %s554 = sand.u32 %s39, 1
        %s555 = scalar_lea.sflag [#allocation10], %s554
        %s556 = sand.u32 %s167, 1
        %s557 = smul.addr %s556, 128
        %s558 = scalar_lea.vmem [#allocation9], %s557
        %p559 = pneg %p180
        %p560 = pneg %p177
        %s561 = sand.u32 %s39, 1
        %s562 = scalar_lea.sflag [#allocation10], %s561
        %s563 = sand.u32 %s193, 1
        %s564 = smul.addr %s563, 128
        %s565 = scalar_lea.vmem [#allocation11], %s564
        %p566 = pneg %p206
        %p567 = pneg %p203
        %s568 = sand.u32 %s219, 1
        %s569 = scalar_lea.sflag [#allocation13], %s568
        %s570 = sand.u32 %s219, 1
        %s571 = smul.addr %s570, 128
        %s572 = scalar_lea.vmem [#allocation12], %s571
        %p573 = pneg %p232
        %p574 = pneg %p229
        %p575 = pneg %p262
        %p576 = pneg %p259
        %s577 = sand.u32 %s249, 1
        %s578 = scalar_lea.sflag [#allocation5], %s577
        %s579 = sand.u32 %s249, 1
        %s580 = smul.addr %s579, 64
        %s581 = scalar_lea.vmem [#allocation14], %s580
        %p582 = pneg %p292
        %p583 = pneg %p289
        %s584 = sand.u32 %s39, 1
        %s585 = scalar_lea.sflag [#allocation16], %s584
        %s586 = sand.u32 %s279, 1
        %s587 = smul.addr %s586, 64
        %s588 = scalar_lea.vmem [#allocation15], %s587
        %p589 = pneg %p322
        %p590 = pneg %p319
        %s591 = sand.u32 %s39, 1
        %s592 = scalar_lea.sflag [#allocation16], %s591
        %s593 = sand.u32 %s309, 1
        %s594 = smul.addr %s593, 64
        %s595 = scalar_lea.vmem [#allocation17], %s594
        %s596 = smul.u32 16, %s45
        %s597 = smul.u32 16, %s45
        %s598 = smul.u32 16, %s45
        %s599 = smul.u32 16, %s45
        %s600 = smul.u32 16, %s45
        %s601 = smul.u32 16, %s45
        %p603 = scmp.eq.s32.totalorder %s46, 0
        // Predicated region
        $region73: #{tpu_custom_call.1} parent=47 // pred_check
          %p604 = pneg %p603
        $region74: #{tpu_custom_call.1} parent=47 // pred_check_branch
          %606 = sbr.rel (%p604) target = $region76
        $region75: #{tpu_custom_call.1} parent=47 // pred_region
          %v607 = vld [vmem:[%s481] sm:$0xff]
          %v608 = vld [vmem:[%s481 + $0x8] sm:$0xff]
          %v609 = vld [vmem:[%s481 + $0x10] sm:$0xff]
          %v610 = vld [vmem:[%s481 + $0x18] sm:$0xff]
          %v611 = vld [vmem:[%s481 + $0x20] sm:$0xff]
          %v612 = vld [vmem:[%s481 + $0x28] sm:$0xff]
          %v613 = vld [vmem:[%s481 + $0x30] sm:$0xff]
          %v614 = vld [vmem:[%s481 + $0x38] sm:$0xff]
          %v615 = vld [vmem:[%s481 + $0x40] sm:$0xff]
          %v616 = vld [vmem:[%s481 + $0x48] sm:$0xff]
          %v617 = vld [vmem:[%s481 + $0x50] sm:$0xff]
          %v618 = vld [vmem:[%s481 + $0x58] sm:$0xff]
          %v619 = vld [vmem:[%s481 + $0x60] sm:$0xff]
          %v620 = vld [vmem:[%s481 + $0x68] sm:$0xff]
          %v621 = vld [vmem:[%s481 + $0x70] sm:$0xff]
          %v622 = vld [vmem:[%s481 + $0x78] sm:$0xff]
          %v623 = vld [vmem:[%s481 + $0x80] sm:$0xff]
          %v624 = vld [vmem:[%s481 + $0x88] sm:$0xff]
          %v625 = vld [vmem:[%s481 + $0x90] sm:$0xff]
          %v626 = vld [vmem:[%s481 + $0x98] sm:$0xff]
          %v627 = vld [vmem:[%s481 + $0xa0] sm:$0xff]
          %v628 = vld [vmem:[%s481 + $0xa8] sm:$0xff]
          %v629 = vld [vmem:[%s481 + $0xb0] sm:$0xff]
          %v630 = vld [vmem:[%s481 + $0xb8] sm:$0xff]
          %v631 = vld [vmem:[%s481 + $0xc0] sm:$0xff]
          %v632 = vld [vmem:[%s481 + $0xc8] sm:$0xff]
          %v633 = vld [vmem:[%s481 + $0xd0] sm:$0xff]
          %v634 = vld [vmem:[%s481 + $0xd8] sm:$0xff]
          %v635 = vld [vmem:[%s481 + $0xe0] sm:$0xff]
          %v636 = vld [vmem:[%s481 + $0xe8] sm:$0xff]
          %v637 = vld [vmem:[%s481 + $0xf0] sm:$0xff]
          %v638 = vld [vmem:[%s481 + $0xf8] sm:$0xff]
          %v639 = vmul.f32 %v607, %v607
          %v640 = vmul.f32 %v608, %v608
          %v641 = vmul.f32 %v609, %v609
          %v642 = vmul.f32 %v610, %v610
          %v643 = vmul.f32 %v611, %v611
          %v644 = vmul.f32 %v612, %v612
          %v645 = vmul.f32 %v613, %v613
          %v646 = vmul.f32 %v614, %v614
          %v647 = vmul.f32 %v615, %v615
          %v648 = vmul.f32 %v616, %v616
          %v649 = vmul.f32 %v617, %v617
          %v650 = vmul.f32 %v618, %v618
          %v651 = vmul.f32 %v619, %v619
          %v652 = vmul.f32 %v620, %v620
          %v653 = vmul.f32 %v621, %v621
          %v654 = vmul.f32 %v622, %v622
          %v655 = vmul.f32 %v623, %v623
          %v656 = vmul.f32 %v624, %v624
          %v657 = vmul.f32 %v625, %v625
          %v658 = vmul.f32 %v626, %v626
          %v659 = vmul.f32 %v627, %v627
          %v660 = vmul.f32 %v628, %v628
          %v661 = vmul.f32 %v629, %v629
          %v662 = vmul.f32 %v630, %v630
          %v663 = vmul.f32 %v631, %v631
          %v664 = vmul.f32 %v632, %v632
          %v665 = vmul.f32 %v633, %v633
          %v666 = vmul.f32 %v634, %v634
          %v667 = vmul.f32 %v635, %v635
          %v668 = vmul.f32 %v636, %v636
          %v669 = vmul.f32 %v637, %v637
          %v670 = vmul.f32 %v638, %v638
          %v671 = vadd.f32 %v639, %v640
          %672 = vadd.xlane.f32.xlu0 %v671
          %v673 = vpop.xlane.xlu0 %672
          %v674 = vadd.f32 %v641, %v642
          %675 = vadd.xlane.f32.xlu0 %v674
          %v676 = vpop.xlane.xlu0 %675
          %v677 = vadd.f32 %v643, %v644
          %678 = vadd.xlane.f32.xlu0 %v677
          %v679 = vpop.xlane.xlu0 %678
          %v680 = vadd.f32 %v645, %v646
          %681 = vadd.xlane.f32.xlu0 %v680
          %v682 = vpop.xlane.xlu0 %681
          %v683 = vadd.f32 %v647, %v648
          %684 = vadd.xlane.f32.xlu0 %v683
          %v685 = vpop.xlane.xlu0 %684
          %v686 = vadd.f32 %v649, %v650
          %687 = vadd.xlane.f32.xlu0 %v686
          %v688 = vpop.xlane.xlu0 %687
          %v689 = vadd.f32 %v651, %v652
          %690 = vadd.xlane.f32.xlu0 %v689
          %v691 = vpop.xlane.xlu0 %690
          %v692 = vadd.f32 %v653, %v654
          %693 = vadd.xlane.f32.xlu0 %v692
          %v694 = vpop.xlane.xlu0 %693
          %v695 = vadd.f32 %v655, %v656
          %696 = vadd.xlane.f32.xlu0 %v695
          %v697 = vpop.xlane.xlu0 %696
          %v698 = vadd.f32 %v657, %v658
          %699 = vadd.xlane.f32.xlu0 %v698
          %v700 = vpop.xlane.xlu0 %699
          %v701 = vadd.f32 %v659, %v660
          %702 = vadd.xlane.f32.xlu0 %v701
          %v703 = vpop.xlane.xlu0 %702
          %v704 = vadd.f32 %v661, %v662
          %705 = vadd.xlane.f32.xlu0 %v704
          %v706 = vpop.xlane.xlu0 %705
          %v707 = vadd.f32 %v663, %v664
          %708 = vadd.xlane.f32.xlu0 %v707
          %v709 = vpop.xlane.xlu0 %708
          %v710 = vadd.f32 %v665, %v666
          %711 = vadd.xlane.f32.xlu0 %v710
          %v712 = vpop.xlane.xlu0 %711
          %v713 = vadd.f32 %v667, %v668
          %714 = vadd.xlane.f32.xlu0 %v713
          %v715 = vpop.xlane.xlu0 %714
          %v716 = vadd.f32 %v669, %v670
          %717 = vadd.xlane.f32.xlu0 %v716
          %v718 = vpop.xlane.xlu0 %717
          %v719 = vrcp.pop 256.0
          %v720 = vmul.f32 %v673, %v719
          %v721 = vmul.f32 %v676, %v719
          %v722 = vmul.f32 %v679, %v719
          %v723 = vmul.f32 %v682, %v719
          %v724 = vmul.f32 %v685, %v719
          %v725 = vmul.f32 %v688, %v719
          %v726 = vmul.f32 %v691, %v719
          %v727 = vmul.f32 %v694, %v719
          %v728 = vmul.f32 %v697, %v719
          %v729 = vmul.f32 %v700, %v719
          %v730 = vmul.f32 %v703, %v719
          %v731 = vmul.f32 %v706, %v719
          %v732 = vmul.f32 %v709, %v719
          %v733 = vmul.f32 %v712, %v719
          %v734 = vmul.f32 %v715, %v719
          %v735 = vmul.f32 %v718, %v719
          %v736 = vadd.f32 %v720, 1e-05
          %v737 = vadd.f32 %v721, 1e-05
          %v738 = vadd.f32 %v722, 1e-05
          %v739 = vadd.f32 %v723, 1e-05
          %v740 = vadd.f32 %v724, 1e-05
          %v741 = vadd.f32 %v725, 1e-05
          %v742 = vadd.f32 %v726, 1e-05
          %v743 = vadd.f32 %v727, 1e-05
          %v744 = vadd.f32 %v728, 1e-05
          %v745 = vadd.f32 %v729, 1e-05
          %v746 = vadd.f32 %v730, 1e-05
          %v747 = vadd.f32 %v731, 1e-05
          %v748 = vadd.f32 %v732, 1e-05
          %v749 = vadd.f32 %v733, 1e-05
          %v750 = vadd.f32 %v734, 1e-05
          %v751 = vadd.f32 %v735, 1e-05
          %v752 = vrsqrt.pop %v736
          %v753 = vrsqrt.pop %v737
          %v754 = vrsqrt.pop %v738
          %v755 = vrsqrt.pop %v739
          %v756 = vrsqrt.pop %v740
          %v757 = vrsqrt.pop %v741
          %v758 = vrsqrt.pop %v742
          %v759 = vrsqrt.pop %v743
          %v760 = vrsqrt.pop %v744
          %v761 = vrsqrt.pop %v745
          %v762 = vrsqrt.pop %v746
          %v763 = vrsqrt.pop %v747
          %v764 = vrsqrt.pop %v748
          %v765 = vrsqrt.pop %v749
          %v766 = vrsqrt.pop %v750
          %v767 = vrsqrt.pop %v751
          %v768 = vmul.f32 %v607, %v752
          %v769 = vmul.f32 %v608, %v752
          %v770 = vmul.f32 %v609, %v753
          %v771 = vmul.f32 %v610, %v753
          %v772 = vmul.f32 %v611, %v754
          %v773 = vmul.f32 %v612, %v754
          %v774 = vmul.f32 %v613, %v755
          %v775 = vmul.f32 %v614, %v755
          %v776 = vmul.f32 %v615, %v756
          %v777 = vmul.f32 %v616, %v756
          %v778 = vmul.f32 %v617, %v757
          %v779 = vmul.f32 %v618, %v757
          %v780 = vmul.f32 %v619, %v758
          %v781 = vmul.f32 %v620, %v758
          %v782 = vmul.f32 %v621, %v759
          %v783 = vmul.f32 %v622, %v759
          %v784 = vmul.f32 %v623, %v760
          %v785 = vmul.f32 %v624, %v760
          %v786 = vmul.f32 %v625, %v761
          %v787 = vmul.f32 %v626, %v761
          %v788 = vmul.f32 %v627, %v762
          %v789 = vmul.f32 %v628, %v762
          %v790 = vmul.f32 %v629, %v763
          %v791 = vmul.f32 %v630, %v763
          %v792 = vmul.f32 %v631, %v764
          %v793 = vmul.f32 %v632, %v764
          %v794 = vmul.f32 %v633, %v765
          %v795 = vmul.f32 %v634, %v765
          %v796 = vmul.f32 %v635, %v766
          %v797 = vmul.f32 %v636, %v766
          %v798 = vmul.f32 %v637, %v767
          %v799 = vmul.f32 %v638, %v767
          %v800 = vld [vmem:[%s1] sm:$0x3]
          %v802 = vlaneseq
          %v803 = vshrl.u32 %v802, 7
          %v804 = vsub.s32 0, %v803
          %v805 = vrot.slane %v800, %v804
          %v806 = vlaneseq
          %v807 = vshrl.u32 %v806, 7
          %v808 = vsub.s32 1, %v807
          %v809 = vrot.slane %v800, %v808
          %v812 = vmul.f32 %v768, %v805
          %v813 = vmul.f32 %v769, %v809
          %v814 = vmul.f32 %v770, %v805
          %v815 = vmul.f32 %v771, %v809
          %v816 = vmul.f32 %v772, %v805
          %v817 = vmul.f32 %v773, %v809
          %v818 = vmul.f32 %v774, %v805
          %v819 = vmul.f32 %v775, %v809
          %v820 = vmul.f32 %v776, %v805
          %v821 = vmul.f32 %v777, %v809
          %v822 = vmul.f32 %v778, %v805
          %v823 = vmul.f32 %v779, %v809
          %v824 = vmul.f32 %v780, %v805
          %v825 = vmul.f32 %v781, %v809
          %v826 = vmul.f32 %v782, %v805
          %v827 = vmul.f32 %v783, %v809
          %v828 = vmul.f32 %v784, %v805
          %v829 = vmul.f32 %v785, %v809
          %v830 = vmul.f32 %v786, %v805
          %v831 = vmul.f32 %v787, %v809
          %v832 = vmul.f32 %v788, %v805
          %v833 = vmul.f32 %v789, %v809
          %v834 = vmul.f32 %v790, %v805
          %v835 = vmul.f32 %v791, %v809
          %v836 = vmul.f32 %v792, %v805
          %v837 = vmul.f32 %v793, %v809
          %v838 = vmul.f32 %v794, %v805
          %v839 = vmul.f32 %v795, %v809
          %v840 = vmul.f32 %v796, %v805
          %v841 = vmul.f32 %v797, %v809
          %v842 = vmul.f32 %v798, %v805
          %v843 = vmul.f32 %v799, %v809
          %v844 = vpack.c.bf16 %v814, %v812
          %v845 = vpack.c.bf16 %v815, %v813
          %v846 = vpack.c.bf16 %v818, %v816
          %v847 = vpack.c.bf16 %v819, %v817
          %v848 = vpack.c.bf16 %v822, %v820
          %v849 = vpack.c.bf16 %v823, %v821
          %v850 = vpack.c.bf16 %v826, %v824
          %v851 = vpack.c.bf16 %v827, %v825
          %v852 = vpack.c.bf16 %v830, %v828
          %v853 = vpack.c.bf16 %v831, %v829
          %v854 = vpack.c.bf16 %v834, %v832
          %v855 = vpack.c.bf16 %v835, %v833
          %v856 = vpack.c.bf16 %v838, %v836
          %v857 = vpack.c.bf16 %v839, %v837
          %v858 = vpack.c.bf16 %v842, %v840
          %v859 = vpack.c.bf16 %v843, %v841
          %860 = vst [vmem:[#allocation2] sm:$0xff] %v844
          %861 = vst [vmem:[#allocation2 + $0x8] sm:$0xff] %v845
          %862 = vst [vmem:[#allocation2 + $0x10] sm:$0xff] %v846
          %863 = vst [vmem:[#allocation2 + $0x18] sm:$0xff] %v847
          %864 = vst [vmem:[#allocation2 + $0x20] sm:$0xff] %v848
          %865 = vst [vmem:[#allocation2 + $0x28] sm:$0xff] %v849
          %866 = vst [vmem:[#allocation2 + $0x30] sm:$0xff] %v850
          %867 = vst [vmem:[#allocation2 + $0x38] sm:$0xff] %v851
          %868 = vst [vmem:[#allocation2 + $0x40] sm:$0xff] %v852
          %869 = vst [vmem:[#allocation2 + $0x48] sm:$0xff] %v853
          %870 = vst [vmem:[#allocation2 + $0x50] sm:$0xff] %v854
          %871 = vst [vmem:[#allocation2 + $0x58] sm:$0xff] %v855
          %872 = vst [vmem:[#allocation2 + $0x60] sm:$0xff] %v856
          %873 = vst [vmem:[#allocation2 + $0x68] sm:$0xff] %v857
          %874 = vst [vmem:[#allocation2 + $0x70] sm:$0xff] %v858
          %875 = vst [vmem:[#allocation2 + $0x78] sm:$0xff] %v859
        $region76: #{tpu_custom_call.1} parent=47 // pred_fallthru
          _
        %v876 = vld [vmem:[#allocation2] sm:$0xff]
        %v877 = vld [vmem:[#allocation2 + $0x8] sm:$0xff]
        %v878 = vld [vmem:[#allocation2 + $0x10] sm:$0xff]
        %v879 = vld [vmem:[#allocation2 + $0x18] sm:$0xff]
        %v880 = vld [vmem:[#allocation2 + $0x20] sm:$0xff]
        %v881 = vld [vmem:[#allocation2 + $0x28] sm:$0xff]
        %v882 = vld [vmem:[#allocation2 + $0x30] sm:$0xff]
        %v883 = vld [vmem:[#allocation2 + $0x38] sm:$0xff]
        %v884 = vld [vmem:[#allocation2 + $0x40] sm:$0xff]
        %v885 = vld [vmem:[#allocation2 + $0x48] sm:$0xff]
        %v886 = vld [vmem:[#allocation2 + $0x50] sm:$0xff]
        %v887 = vld [vmem:[#allocation2 + $0x58] sm:$0xff]
        %v888 = vld [vmem:[#allocation2 + $0x60] sm:$0xff]
        %v889 = vld [vmem:[#allocation2 + $0x68] sm:$0xff]
        %v890 = vld [vmem:[#allocation2 + $0x70] sm:$0xff]
        %v891 = vld [vmem:[#allocation2 + $0x78] sm:$0xff]
        %v892 = vld [vmem:[%s490] sm:$0xff]
        %v893 = vld [vmem:[%s490 + $0x8] sm:$0xff]
        %v894 = vld [vmem:[%s490 + $0x10] sm:$0xff]
        %v895 = vld [vmem:[%s490 + $0x18] sm:$0xff]
        %v896 = vld [vmem:[%s490 + $0x20] sm:$0xff]
        %v897 = vld [vmem:[%s490 + $0x28] sm:$0xff]
        %v898 = vld [vmem:[%s490 + $0x30] sm:$0xff]
        %v899 = vld [vmem:[%s490 + $0x38] sm:$0xff]
        %v900 = vld [vmem:[%s490 + $0x40] sm:$0xff]
        %v901 = vld [vmem:[%s490 + $0x48] sm:$0xff]
        %v902 = vld [vmem:[%s490 + $0x50] sm:$0xff]
        %v903 = vld [vmem:[%s490 + $0x58] sm:$0xff]
        %v904 = vld [vmem:[%s490 + $0x60] sm:$0xff]
        %v905 = vld [vmem:[%s490 + $0x68] sm:$0xff]
        %v906 = vld [vmem:[%s490 + $0x70] sm:$0xff]
        %v907 = vld [vmem:[%s490 + $0x78] sm:$0xff]
        %v908 = vld [vmem:[%s499] sm:$0xff]
        %v909 = vld [vmem:[%s499 + $0x8] sm:$0xff]
        %v910 = vld [vmem:[%s499 + $0x10] sm:$0xff]
        %v911 = vld [vmem:[%s499 + $0x18] sm:$0xff]
        %v912 = vld [vmem:[%s499 + $0x20] sm:$0xff]
        %v913 = vld [vmem:[%s499 + $0x28] sm:$0xff]
        %v914 = vld [vmem:[%s499 + $0x30] sm:$0xff]
        %v915 = vld [vmem:[%s499 + $0x38] sm:$0xff]
        %v916 = vld [vmem:[%s499 + $0x40] sm:$0xff]
        %v917 = vld [vmem:[%s499 + $0x48] sm:$0xff]
        %v918 = vld [vmem:[%s499 + $0x50] sm:$0xff]
        %v919 = vld [vmem:[%s499 + $0x58] sm:$0xff]
        %v920 = vld [vmem:[%s499 + $0x60] sm:$0xff]
        %v921 = vld [vmem:[%s499 + $0x68] sm:$0xff]
        %v922 = vld [vmem:[%s499 + $0x70] sm:$0xff]
        %v923 = vld [vmem:[%s499 + $0x78] sm:$0xff]
        %v924 = vld [vmem:[%s508] sm:$0xf]
        %v925 = vld [vmem:[%s508 + $0x4] sm:$0xf]
        %v926 = vld [vmem:[%s508 + $0x8] sm:$0xf]
        %v927 = vld [vmem:[%s508 + $0xc] sm:$0xf]
        %v928 = vld [vmem:[%s508 + $0x10] sm:$0xf]
        %v929 = vld [vmem:[%s508 + $0x14] sm:$0xf]
        %v930 = vld [vmem:[%s508 + $0x18] sm:$0xf]
        %v931 = vld [vmem:[%s508 + $0x1c] sm:$0xf]
        %v932 = vld [vmem:[%s508 + $0x20] sm:$0xf]
        %v933 = vld [vmem:[%s508 + $0x24] sm:$0xf]
        %v934 = vld [vmem:[%s508 + $0x28] sm:$0xf]
        %v935 = vld [vmem:[%s508 + $0x2c] sm:$0xf]
        %v936 = vld [vmem:[%s508 + $0x30] sm:$0xf]
        %v937 = vld [vmem:[%s508 + $0x34] sm:$0xf]
        %v938 = vld [vmem:[%s508 + $0x38] sm:$0xf]
        %v939 = vld [vmem:[%s508 + $0x3c] sm:$0xf]
        %v940 = vld [vmem:[%s508 + $0x40] sm:$0xf]
        %v941 = vld [vmem:[%s508 + $0x44] sm:$0xf]
        %v942 = vld [vmem:[%s508 + $0x48] sm:$0xf]
        %v943 = vld [vmem:[%s508 + $0x4c] sm:$0xf]
        %v944 = vld [vmem:[%s508 + $0x50] sm:$0xf]
        %v945 = vld [vmem:[%s508 + $0x54] sm:$0xf]
        %v946 = vld [vmem:[%s508 + $0x58] sm:$0xf]
        %v947 = vld [vmem:[%s508 + $0x5c] sm:$0xf]
        %v948 = vld [vmem:[%s508 + $0x60] sm:$0xf]
        %v949 = vld [vmem:[%s508 + $0x64] sm:$0xf]
        %v950 = vld [vmem:[%s508 + $0x68] sm:$0xf]
        %v951 = vld [vmem:[%s508 + $0x6c] sm:$0xf]
        %v952 = vld [vmem:[%s508 + $0x70] sm:$0xf]
        %v953 = vld [vmem:[%s508 + $0x74] sm:$0xf]
        %v954 = vld [vmem:[%s508 + $0x78] sm:$0xf]
        %v955 = vld [vmem:[%s508 + $0x7c] sm:$0xf]
        %v988 = vunpack.c.l.b16 %v924
        %v989 = vunpack.c.l.b16 %v925
        %v990 = vunpack.c.l.b16 %v926
        %v991 = vunpack.c.l.b16 %v927
        %v992 = vunpack.c.l.b16 %v928
        %v993 = vunpack.c.l.b16 %v929
        %v994 = vunpack.c.l.b16 %v930
        %v995 = vunpack.c.l.b16 %v931
        %v996 = vunpack.c.l.b16 %v932
        %v997 = vunpack.c.l.b16 %v933
        %v998 = vunpack.c.l.b16 %v934
        %v999 = vunpack.c.l.b16 %v935
        %v1000 = vunpack.c.l.b16 %v936
        %v1001 = vunpack.c.l.b16 %v937
        %v1002 = vunpack.c.l.b16 %v938
        %v1003 = vunpack.c.l.b16 %v939
        %v1004 = vunpack.c.l.b16 %v940
        %v1005 = vunpack.c.l.b16 %v941
        %v1006 = vunpack.c.l.b16 %v942
        %v1007 = vunpack.c.l.b16 %v943
        %v1008 = vunpack.c.l.b16 %v944
        %v1009 = vunpack.c.l.b16 %v945
        %v1010 = vunpack.c.l.b16 %v946
        %v1011 = vunpack.c.l.b16 %v947
        %v1012 = vunpack.c.l.b16 %v948
        %v1013 = vunpack.c.l.b16 %v949
        %v1014 = vunpack.c.l.b16 %v950
        %v1015 = vunpack.c.l.b16 %v951
        %v1016 = vunpack.c.l.b16 %v952
        %v1017 = vunpack.c.l.b16 %v953
        %v1018 = vunpack.c.l.b16 %v954
        %v1019 = vunpack.c.l.b16 %v955
        %v1020 = vpack.c.b16 %v989, %v988
        %v1021 = vpack.c.b16 %v991, %v990
        %v1022 = vpack.c.b16 %v993, %v992
        %v1023 = vpack.c.b16 %v995, %v994
        %v1024 = vpack.c.b16 %v997, %v996
        %v1025 = vpack.c.b16 %v999, %v998
        %v1026 = vpack.c.b16 %v1001, %v1000
        %v1027 = vpack.c.b16 %v1003, %v1002
        %v1028 = vpack.c.b16 %v1005, %v1004
        %v1029 = vpack.c.b16 %v1007, %v1006
        %v1030 = vpack.c.b16 %v1009, %v1008
        %v1031 = vpack.c.b16 %v1011, %v1010
        %v1032 = vpack.c.b16 %v1013, %v1012
        %v1033 = vpack.c.b16 %v1015, %v1014
        %v1034 = vpack.c.b16 %v1017, %v1016
        %v1035 = vpack.c.b16 %v1019, %v1018
        %1052 = vmatprep.subr.bf16.mxu0 0
        %1053 = vmatpush1.bf16.msra.mxu0 %v1020
        %1054 = vmatprep.subr.bf16.mxu0 0
        %1055 = vmatpush1.bf16.msra.mxu0 %v1021
        %1056 = vmatprep.subr.bf16.mxu0 0
        %1057 = vmatpush1.bf16.msra.mxu0 %v1022
        %1058 = vmatprep.subr.bf16.mxu0 0
        %1059 = vmatpush1.bf16.msra.mxu0 %v1023
        %1060 = vmatprep.subr.bf16.mxu0 0
        %1061 = vmatpush1.bf16.msra.mxu0 %v1024
        %1062 = vmatprep.subr.bf16.mxu0 0
        %1063 = vmatpush1.bf16.msra.mxu0 %v1025
        %1064 = vmatprep.subr.bf16.mxu0 0
        %1065 = vmatpush1.bf16.msra.mxu0 %v1026
        %1066 = vmatprep.subr.bf16.mxu0 0
        %1067 = vmatpush1.bf16.msra.mxu0 %v1027
        %1068 = vmatprep.subr.bf16.mxu0 0
        %1069 = vmatpush1.bf16.msra.mxu0 %v1028
        %1070 = vmatprep.subr.bf16.mxu0 0
        %1071 = vmatpush1.bf16.msra.mxu0 %v1029
        %1072 = vmatprep.subr.bf16.mxu0 0
        %1073 = vmatpush1.bf16.msra.mxu0 %v1030
        %1074 = vmatprep.subr.bf16.mxu0 0
        %1075 = vmatpush1.bf16.msra.mxu0 %v1031
        %1076 = vmatprep.subr.bf16.mxu0 0
        %1077 = vmatpush1.bf16.msra.mxu0 %v1032
        %1078 = vmatprep.subr.bf16.mxu0 0
        %1079 = vmatpush1.bf16.msra.mxu0 %v1033
        %1080 = vmatprep.subr.bf16.mxu0 0
        %1081 = vmatpush1.bf16.msra.mxu0 %v1034
        %1082 = vmatprep.subr.bf16.mxu0 0
        %1083 = vmatpush1.bf16.msra.mxu0 %v1035
        %1084 = vmatprep.mubr.bf16.mxu0 %v877
        %1085 = vmatmul.mubr.bf16.gmra.mrb[0].mxu0 %v876
        %v1086 = vpop.f32.mrb[0].mxu0
        %v1087 = vadd.f32 0.0, %v1086
        %v1088 = vpop.f32.mrb[0].mxu0
        %v1089 = vpop.f32.mrb[0].mxu0
        %v1090 = vadd.f32 0.0, %v1089
        %v1091 = vpop.f32.mrb[0].mxu0
        %1092 = vmatprep.mubr.bf16.mxu0 %v879
        %1093 = vmatmul.mubr.bf16.gmra.mrb[0].mxu0 %v878
        %v1094 = vpop.f32.mrb[0].mxu0
        %v1095 = vadd.f32 0.0, %v1094
        %v1096 = vpop.f32.mrb[0].mxu0
        %v1097 = vpop.f32.mrb[0].mxu0
        %v1098 = vadd.f32 0.0, %v1097
        %v1099 = vpop.f32.mrb[0].mxu0
        %1100 = vmatprep.mubr.bf16.mxu0 %v881
        %1101 = vmatmul.mubr.bf16.gmra.mrb[0].mxu0 %v880
        %v1102 = vpop.f32.mrb[0].mxu0
        %v1103 = vadd.f32 0.0, %v1102
        %v1104 = vpop.f32.mrb[0].mxu0
        %v1105 = vpop.f32.mrb[0].mxu0
        %v1106 = vadd.f32 0.0, %v1105
        %v1107 = vpop.f32.mrb[0].mxu0
        %1108 = vmatprep.mubr.bf16.mxu0 %v883
        %1109 = vmatmul.mubr.bf16.gmra.mrb[0].mxu0 %v882
        %v1110 = vpop.f32.mrb[0].mxu0
        %v1111 = vadd.f32 0.0, %v1110
        %v1112 = vpop.f32.mrb[0].mxu0
        %v1113 = vpop.f32.mrb[0].mxu0
        %v1114 = vadd.f32 0.0, %v1113
        %v1115 = vpop.f32.mrb[0].mxu0
        %1116 = vmatprep.mubr.bf16.mxu0 %v885
        %1117 = vmatmul.mubr.bf16.gmra.mrb[0].mxu0 %v884
        %v1118 = vpop.f32.mrb[0].mxu0
        %v1119 = vadd.f32 0.0, %v1118
        %v1120 = vpop.f32.mrb[0].mxu0
        %v1121 = vpop.f32.mrb[0].mxu0
        %v1122 = vadd.f32 0.0, %v1121
        %v1123 = vpop.f32.mrb[0].mxu0
        %1124 = vmatprep.mubr.bf16.mxu0 %v887
        %1125 = vmatmul.mubr.bf16.gmra.mrb[0].mxu0 %v886
        %v1126 = vpop.f32.mrb[0].mxu0
        %v1127 = vadd.f32 0.0, %v1126
        %v1128 = vpop.f32.mrb[0].mxu0
        %v1129 = vpop.f32.mrb[0].mxu0
        %v1130 = vadd.f32 0.0, %v1129
        %v1131 = vpop.f32.mrb[0].mxu0
        %1132 = vmatprep.mubr.bf16.mxu0 %v889
        %1133 = vmatmul.mubr.bf16.gmra.mrb[0].mxu0 %v888
        %v1134 = vpop.f32.mrb[0].mxu0
        %v1135 = vadd.f32 0.0, %v1134
        %v1136 = vpop.f32.mrb[0].mxu0
        %v1137 = vpop.f32.mrb[0].mxu0
        %v1138 = vadd.f32 0.0, %v1137
        %v1139 = vpop.f32.mrb[0].mxu0
        %1140 = vmatprep.mubr.bf16.mxu0 %v891
        %1141 = vmatmul.mubr.bf16.gmra.mrb[0].mxu0 %v890
        %v1142 = vpop.f32.mrb[0].mxu0
        %v1143 = vadd.f32 0.0, %v1142
        %v1144 = vpop.f32.mrb[0].mxu0
        %v1145 = vpop.f32.mrb[0].mxu0
        %v1146 = vadd.f32 0.0, %v1145
        %v1147 = vpop.f32.mrb[0].mxu0
        %1148 = vdwg.mxu0
        %v1149 = vld [vmem:[%s517] sm:$0xf]
        %v1150 = vld [vmem:[%s517 + $0x4] sm:$0xf]
        %v1151 = vld [vmem:[%s517 + $0x8] sm:$0xf]
        %v1152 = vld [vmem:[%s517 + $0xc] sm:$0xf]
        %v1153 = vld [vmem:[%s517 + $0x10] sm:$0xf]
        %v1154 = vld [vmem:[%s517 + $0x14] sm:$0xf]
        %v1155 = vld [vmem:[%s517 + $0x18] sm:$0xf]
        %v1156 = vld [vmem:[%s517 + $0x1c] sm:$0xf]
        %v1157 = vld [vmem:[%s517 + $0x20] sm:$0xf]
        %v1158 = vld [vmem:[%s517 + $0x24] sm:$0xf]
        %v1159 = vld [vmem:[%s517 + $0x28] sm:$0xf]
        %v1160 = vld [vmem:[%s517 + $0x2c] sm:$0xf]
        %v1161 = vld [vmem:[%s517 + $0x30] sm:$0xf]
        %v1162 = vld [vmem:[%s517 + $0x34] sm:$0xf]
        %v1163 = vld [vmem:[%s517 + $0x38] sm:$0xf]
        %v1164 = vld [vmem:[%s517 + $0x3c] sm:$0xf]
        %v1165 = vld [vmem:[%s517 + $0x40] sm:$0xf]
        %v1166 = vld [vmem:[%s517 + $0x44] sm:$0xf]
        %v1167 = vld [vmem:[%s517 + $0x48] sm:$0xf]
        %v1168 = vld [vmem:[%s517 + $0x4c] sm:$0xf]
        %v1169 = vld [vmem:[%s517 + $0x50] sm:$0xf]
        %v1170 = vld [vmem:[%s517 + $0x54] sm:$0xf]
        %v1171 = vld [vmem:[%s517 + $0x58] sm:$0xf]
        %v1172 = vld [vmem:[%s517 + $0x5c] sm:$0xf]
        %v1173 = vld [vmem:[%s517 + $0x60] sm:$0xf]
        %v1174 = vld [vmem:[%s517 + $0x64] sm:$0xf]
        %v1175 = vld [vmem:[%s517 + $0x68] sm:$0xf]
        %v1176 = vld [vmem:[%s517 + $0x6c] sm:$0xf]
        %v1177 = vld [vmem:[%s517 + $0x70] sm:$0xf]
        %v1178 = vld [vmem:[%s517 + $0x74] sm:$0xf]
        %v1179 = vld [vmem:[%s517 + $0x78] sm:$0xf]
        %v1180 = vld [vmem:[%s517 + $0x7c] sm:$0xf]
        %v1213 = vunpack.c.l.b16 %v1149
        %v1214 = vunpack.c.l.b16 %v1150
        %v1215 = vunpack.c.l.b16 %v1151
        %v1216 = vunpack.c.l.b16 %v1152
        %v1217 = vunpack.c.l.b16 %v1153
        %v1218 = vunpack.c.l.b16 %v1154
        %v1219 = vunpack.c.l.b16 %v1155
        %v1220 = vunpack.c.l.b16 %v1156
        %v1221 = vunpack.c.l.b16 %v1157
        %v1222 = vunpack.c.l.b16 %v1158
        %v1223 = vunpack.c.l.b16 %v1159
        %v1224 = vunpack.c.l.b16 %v1160
        %v1225 = vunpack.c.l.b16 %v1161
        %v1226 = vunpack.c.l.b16 %v1162
        %v1227 = vunpack.c.l.b16 %v1163
        %v1228 = vunpack.c.l.b16 %v1164
        %v1229 = vunpack.c.l.b16 %v1165
        %v1230 = vunpack.c.l.b16 %v1166
        %v1231 = vunpack.c.l.b16 %v1167
        %v1232 = vunpack.c.l.b16 %v1168
        %v1233 = vunpack.c.l.b16 %v1169
        %v1234 = vunpack.c.l.b16 %v1170
        %v1235 = vunpack.c.l.b16 %v1171
        %v1236 = vunpack.c.l.b16 %v1172
        %v1237 = vunpack.c.l.b16 %v1173
        %v1238 = vunpack.c.l.b16 %v1174
        %v1239 = vunpack.c.l.b16 %v1175
        %v1240 = vunpack.c.l.b16 %v1176
        %v1241 = vunpack.c.l.b16 %v1177
        %v1242 = vunpack.c.l.b16 %v1178
        %v1243 = vunpack.c.l.b16 %v1179
        %v1244 = vunpack.c.l.b16 %v1180
        %v1245 = vpack.c.b16 %v1214, %v1213
        %v1246 = vpack.c.b16 %v1216, %v1215
        %v1247 = vpack.c.b16 %v1218, %v1217
        %v1248 = vpack.c.b16 %v1220, %v1219
        %v1249 = vpack.c.b16 %v1222, %v1221
        %v1250 = vpack.c.b16 %v1224, %v1223
        %v1251 = vpack.c.b16 %v1226, %v1225
        %v1252 = vpack.c.b16 %v1228, %v1227
        %v1253 = vpack.c.b16 %v1230, %v1229
        %v1254 = vpack.c.b16 %v1232, %v1231
        %v1255 = vpack.c.b16 %v1234, %v1233
        %v1256 = vpack.c.b16 %v1236, %v1235
        %v1257 = vpack.c.b16 %v1238, %v1237
        %v1258 = vpack.c.b16 %v1240, %v1239
        %v1259 = vpack.c.b16 %v1242, %v1241
        %v1260 = vpack.c.b16 %v1244, %v1243
        %1277 = vmatprep.subr.bf16.mxu0 0
        %1278 = vmatpush1.bf16.msra.mxu0 %v1245
        %1279 = vmatprep.subr.bf16.mxu0 0
        %1280 = vmatpush1.bf16.msra.mxu0 %v1246
        %1281 = vmatprep.subr.bf16.mxu0 0
        %1282 = vmatpush1.bf16.msra.mxu0 %v1247
        %1283 = vmatprep.subr.bf16.mxu0 0
        %1284 = vmatpush1.bf16.msra.mxu0 %v1248
        %1285 = vmatprep.subr.bf16.mxu0 0
        %1286 = vmatpush1.bf16.msra.mxu0 %v1249
        %1287 = vmatprep.subr.bf16.mxu0 0
        %1288 = vmatpush1.bf16.msra.mxu0 %v1250
        %1289 = vmatprep.subr.bf16.mxu0 0
        %1290 = vmatpush1.bf16.msra.mxu0 %v1251
        %1291 = vmatprep.subr.bf16.mxu0 0
        %1292 = vmatpush1.bf16.msra.mxu0 %v1252
        %1293 = vmatprep.subr.bf16.mxu0 0
        %1294 = vmatpush1.bf16.msra.mxu0 %v1253
        %1295 = vmatprep.subr.bf16.mxu0 0
        %1296 = vmatpush1.bf16.msra.mxu0 %v1254
        %1297 = vmatprep.subr.bf16.mxu0 0
        %1298 = vmatpush1.bf16.msra.mxu0 %v1255
        %1299 = vmatprep.subr.bf16.mxu0 0
        %1300 = vmatpush1.bf16.msra.mxu0 %v1256
        %1301 = vmatprep.subr.bf16.mxu0 0
        %1302 = vmatpush1.bf16.msra.mxu0 %v1257
        %1303 = vmatprep.subr.bf16.mxu0 0
        %1304 = vmatpush1.bf16.msra.mxu0 %v1258
        %1305 = vmatprep.subr.bf16.mxu0 0
        %1306 = vmatpush1.bf16.msra.mxu0 %v1259
        %1307 = vmatprep.subr.bf16.mxu0 0
        %1308 = vmatpush1.bf16.msra.mxu0 %v1260
        %1309 = vmatprep.mubr.bf16.mxu0 %v877
        %1310 = vmatmul.mubr.bf16.gmra.mrb[0].mxu0 %v876
        %v1311 = vpop.f32.mrb[0].mxu0
        %v1312 = vadd.f32 0.0, %v1311
        %v1313 = vpop.f32.mrb[0].mxu0
        %v1314 = vpop.f32.mrb[0].mxu0
        %v1315 = vadd.f32 0.0, %v1314
        %v1316 = vpop.f32.mrb[0].mxu0
        %1317 = vmatprep.mubr.bf16.mxu0 %v879
        %1318 = vmatmul.mubr.bf16.gmra.mrb[0].mxu0 %v878
        %v1319 = vpop.f32.mrb[0].mxu0
        %v1320 = vadd.f32 0.0, %v1319
        %v1321 = vpop.f32.mrb[0].mxu0
        %v1322 = vpop.f32.mrb[0].mxu0
        %v1323 = vadd.f32 0.0, %v1322
        %v1324 = vpop.f32.mrb[0].mxu0
        %1325 = vmatprep.mubr.bf16.mxu0 %v881
        %1326 = vmatmul.mubr.bf16.gmra.mrb[0].mxu0 %v880
        %v1327 = vpop.f32.mrb[0].mxu0
        %v1328 = vadd.f32 0.0, %v1327
        %v1329 = vpop.f32.mrb[0].mxu0
        %v1330 = vpop.f32.mrb[0].mxu0
        %v1331 = vadd.f32 0.0, %v1330
        %v1332 = vpop.f32.mrb[0].mxu0
        %1333 = vmatprep.mubr.bf16.mxu0 %v883
        %1334 = vmatmul.mubr.bf16.gmra.mrb[0].mxu0 %v882
        %v1335 = vpop.f32.mrb[0].mxu0
        %v1336 = vadd.f32 0.0, %v1335
        %v1337 = vpop.f32.mrb[0].mxu0
        %v1338 = vpop.f32.mrb[0].mxu0
        %v1339 = vadd.f32 0.0, %v1338
        %v1340 = vpop.f32.mrb[0].mxu0
        %1341 = vmatprep.mubr.bf16.mxu0 %v885
        %1342 = vmatmul.mubr.bf16.gmra.mrb[0].mxu0 %v884
        %v1343 = vpop.f32.mrb[0].mxu0
        %v1344 = vadd.f32 0.0, %v1343
        %v1345 = vpop.f32.mrb[0].mxu0
        %v1346 = vpop.f32.mrb[0].mxu0
        %v1347 = vadd.f32 0.0, %v1346
        %v1348 = vpop.f32.mrb[0].mxu0
        %1349 = vmatprep.mubr.bf16.mxu0 %v887
        %1350 = vmatmul.mubr.bf16.gmra.mrb[0].mxu0 %v886
        %v1351 = vpop.f32.mrb[0].mxu0
        %v1352 = vadd.f32 0.0, %v1351
        %v1353 = vpop.f32.mrb[0].mxu0
        %v1354 = vpop.f32.mrb[0].mxu0
        %v1355 = vadd.f32 0.0, %v1354
        %v1356 = vpop.f32.mrb[0].mxu0
        %1357 = vmatprep.mubr.bf16.mxu0 %v889
        %1358 = vmatmul.mubr.bf16.gmra.mrb[0].mxu0 %v888
        %v1359 = vpop.f32.mrb[0].mxu0
        %v1360 = vadd.f32 0.0, %v1359
        %v1361 = vpop.f32.mrb[0].mxu0
        %v1362 = vpop.f32.mrb[0].mxu0
        %v1363 = vadd.f32 0.0, %v1362
        %v1364 = vpop.f32.mrb[0].mxu0
        %1365 = vmatprep.mubr.bf16.mxu0 %v891
        %1366 = vmatmul.mubr.bf16.gmra.mrb[0].mxu0 %v890
        %v1367 = vpop.f32.mrb[0].mxu0
        %v1368 = vadd.f32 0.0, %v1367
        %v1369 = vpop.f32.mrb[0].mxu0
        %v1370 = vpop.f32.mrb[0].mxu0
        %v1371 = vadd.f32 0.0, %v1370
        %v1372 = vpop.f32.mrb[0].mxu0
        %1373 = vdwg.mxu0
        %v1374 = vmul.f32 %v1087, %v892
        %v1375 = vmul.f32 %v1090, %v893
        %v1376 = vmul.f32 %v1095, %v894
        %v1377 = vmul.f32 %v1098, %v895
        %v1378 = vmul.f32 %v1103, %v896
        %v1379 = vmul.f32 %v1106, %v897
        %v1380 = vmul.f32 %v1111, %v898
        %v1381 = vmul.f32 %v1114, %v899
        %v1382 = vmul.f32 %v1119, %v900
        %v1383 = vmul.f32 %v1122, %v901
        %v1384 = vmul.f32 %v1127, %v902
        %v1385 = vmul.f32 %v1130, %v903
        %v1386 = vmul.f32 %v1135, %v904
        %v1387 = vmul.f32 %v1138, %v905
        %v1388 = vmul.f32 %v1143, %v906
        %v1389 = vmul.f32 %v1146, %v907
        %1390 = vrot.lane.b32.xlu0 %v1087, 64
        %v1391 = vpop.permute.xlu0 %1390
        %1392 = vrot.lane.b32.xlu0 %v1090, 64
        %v1393 = vpop.permute.xlu0 %1392
        %1394 = vrot.lane.b32.xlu0 %v1095, 64
        %v1395 = vpop.permute.xlu0 %1394
        %1396 = vrot.lane.b32.xlu0 %v1098, 64
        %v1397 = vpop.permute.xlu0 %1396
        %1398 = vrot.lane.b32.xlu0 %v1103, 64
        %v1399 = vpop.permute.xlu0 %1398
        %1400 = vrot.lane.b32.xlu0 %v1106, 64
        %v1401 = vpop.permute.xlu0 %1400
        %1402 = vrot.lane.b32.xlu0 %v1111, 64
        %v1403 = vpop.permute.xlu0 %1402
        %1404 = vrot.lane.b32.xlu0 %v1114, 64
        %v1405 = vpop.permute.xlu0 %1404
        %1406 = vrot.lane.b32.xlu0 %v1119, 64
        %v1407 = vpop.permute.xlu0 %1406
        %1408 = vrot.lane.b32.xlu0 %v1122, 64
        %v1409 = vpop.permute.xlu0 %1408
        %1410 = vrot.lane.b32.xlu0 %v1127, 64
        %v1411 = vpop.permute.xlu0 %1410
        %1412 = vrot.lane.b32.xlu0 %v1130, 64
        %v1413 = vpop.permute.xlu0 %1412
        %1414 = vrot.lane.b32.xlu0 %v1135, 64
        %v1415 = vpop.permute.xlu0 %1414
        %1416 = vrot.lane.b32.xlu0 %v1138, 64
        %v1417 = vpop.permute.xlu0 %1416
        %1418 = vrot.lane.b32.xlu0 %v1143, 64
        %v1419 = vpop.permute.xlu0 %1418
        %1420 = vrot.lane.b32.xlu0 %v1146, 64
        %v1421 = vpop.permute.xlu0 %1420
        %v1422 = vmul.f32 %v1391, %v908
        %v1423 = vmul.f32 %v1393, %v909
        %v1424 = vmul.f32 %v1395, %v910
        %v1425 = vmul.f32 %v1397, %v911
        %v1426 = vmul.f32 %v1399, %v912
        %v1427 = vmul.f32 %v1401, %v913
        %v1428 = vmul.f32 %v1403, %v914
        %v1429 = vmul.f32 %v1405, %v915
        %v1430 = vmul.f32 %v1407, %v916
        %v1431 = vmul.f32 %v1409, %v917
        %v1432 = vmul.f32 %v1411, %v918
        %v1433 = vmul.f32 %v1413, %v919
        %v1434 = vmul.f32 %v1415, %v920
        %v1435 = vmul.f32 %v1417, %v921
        %v1436 = vmul.f32 %v1419, %v922
        %v1437 = vmul.f32 %v1421, %v923
        %v1438 = vadd.f32 %v1374, %v1422
        %v1439 = vadd.f32 %v1375, %v1423
        %v1440 = vadd.f32 %v1376, %v1424
        %v1441 = vadd.f32 %v1377, %v1425
        %v1442 = vadd.f32 %v1378, %v1426
        %v1443 = vadd.f32 %v1379, %v1427
        %v1444 = vadd.f32 %v1380, %v1428
        %v1445 = vadd.f32 %v1381, %v1429
        %v1446 = vadd.f32 %v1382, %v1430
        %v1447 = vadd.f32 %v1383, %v1431
        %v1448 = vadd.f32 %v1384, %v1432
        %v1449 = vadd.f32 %v1385, %v1433
        %v1450 = vadd.f32 %v1386, %v1434
        %v1451 = vadd.f32 %v1387, %v1435
        %v1452 = vadd.f32 %v1388, %v1436
        %v1453 = vadd.f32 %v1389, %v1437
        %v1454 = vmul.f32 %v1438, 0.088388346
        %v1455 = vmul.f32 %v1439, 0.088388346
        %v1456 = vmul.f32 %v1440, 0.088388346
        %v1457 = vmul.f32 %v1441, 0.088388346
        %v1458 = vmul.f32 %v1442, 0.088388346
        %v1459 = vmul.f32 %v1443, 0.088388346
        %v1460 = vmul.f32 %v1444, 0.088388346
        %v1461 = vmul.f32 %v1445, 0.088388346
        %v1462 = vmul.f32 %v1446, 0.088388346
        %v1463 = vmul.f32 %v1447, 0.088388346
        %v1464 = vmul.f32 %v1448, 0.088388346
        %v1465 = vmul.f32 %v1449, 0.088388346
        %v1466 = vmul.f32 %v1450, 0.088388346
        %v1467 = vmul.f32 %v1451, 0.088388346
        %v1468 = vmul.f32 %v1452, 0.088388346
        %v1469 = vmul.f32 %v1453, 0.088388346
        %v1470 = vpack.c.bf16 %v1455, %v1454
        %v1471 = vpack.c.bf16 %v1457, %v1456
        %v1472 = vpack.c.bf16 %v1459, %v1458
        %v1473 = vpack.c.bf16 %v1461, %v1460
        %v1474 = vpack.c.bf16 %v1463, %v1462
        %v1475 = vpack.c.bf16 %v1465, %v1464
        %v1476 = vpack.c.bf16 %v1467, %v1466
        %v1477 = vpack.c.bf16 %v1469, %v1468
        %v1486 = vunpack.c.l.b16 %v1470
        %v1487 = vunpack.c.h.b16 %v1470
        %v1488 = vunpack.c.l.b16 %v1471
        %v1489 = vunpack.c.h.b16 %v1471
        %v1490 = vunpack.c.l.b16 %v1472
        %v1491 = vunpack.c.h.b16 %v1472
        %v1492 = vunpack.c.l.b16 %v1473
        %v1493 = vunpack.c.h.b16 %v1473
        %v1494 = vunpack.c.l.b16 %v1474
        %v1495 = vunpack.c.h.b16 %v1474
        %v1496 = vunpack.c.l.b16 %v1475
        %v1497 = vunpack.c.h.b16 %v1475
        %v1498 = vunpack.c.l.b16 %v1476
        %v1499 = vunpack.c.h.b16 %v1476
        %v1500 = vunpack.c.l.b16 %v1477
        %v1501 = vunpack.c.h.b16 %v1477
        %v1502 = vpack.c.b16 %v1486, %v1486
        %v1503 = vpack.c.b16 %v1487, %v1487
        %v1504 = vpack.c.b16 %v1488, %v1488
        %v1505 = vpack.c.b16 %v1489, %v1489
        %v1506 = vpack.c.b16 %v1490, %v1490
        %v1507 = vpack.c.b16 %v1491, %v1491
        %v1508 = vpack.c.b16 %v1492, %v1492
        %v1509 = vpack.c.b16 %v1493, %v1493
        %v1510 = vpack.c.b16 %v1494, %v1494
        %v1511 = vpack.c.b16 %v1495, %v1495
        %v1512 = vpack.c.b16 %v1496, %v1496
        %v1513 = vpack.c.b16 %v1497, %v1497
        %v1514 = vpack.c.b16 %v1498, %v1498
        %v1515 = vpack.c.b16 %v1499, %v1499
        %v1516 = vpack.c.b16 %v1500, %v1500
        %v1517 = vpack.c.b16 %v1501, %v1501
        %1534 = vst [vmem:[%s581] sm:$0xf] %v1502
        %1535 = vst [vmem:[%s581 + $0x4] sm:$0xf] %v1503
        %1536 = vst [vmem:[%s581 + $0x8] sm:$0xf] %v1504
        %1537 = vst [vmem:[%s581 + $0xc] sm:$0xf] %v1505
        %1538 = vst [vmem:[%s581 + $0x10] sm:$0xf] %v1506
        %1539 = vst [vmem:[%s581 + $0x14] sm:$0xf] %v1507
        %1540 = vst [vmem:[%s581 + $0x18] sm:$0xf] %v1508
        %1541 = vst [vmem:[%s581 + $0x1c] sm:$0xf] %v1509
        %1542 = vst [vmem:[%s581 + $0x20] sm:$0xf] %v1510
        %1543 = vst [vmem:[%s581 + $0x24] sm:$0xf] %v1511
        %1544 = vst [vmem:[%s581 + $0x28] sm:$0xf] %v1512
        %1545 = vst [vmem:[%s581 + $0x2c] sm:$0xf] %v1513
        %1546 = vst [vmem:[%s581 + $0x30] sm:$0xf] %v1514
        %1547 = vst [vmem:[%s581 + $0x34] sm:$0xf] %v1515
        %1548 = vst [vmem:[%s581 + $0x38] sm:$0xf] %v1516
        %1549 = vst [vmem:[%s581 + $0x3c] sm:$0xf] %v1517
        %v1550 = vmul.f32 %v1312, %v892
        %v1551 = vmul.f32 %v1315, %v893
        %v1552 = vmul.f32 %v1320, %v894
        %v1553 = vmul.f32 %v1323, %v895
        %v1554 = vmul.f32 %v1328, %v896
        %v1555 = vmul.f32 %v1331, %v897
        %v1556 = vmul.f32 %v1336, %v898
        %v1557 = vmul.f32 %v1339, %v899
        %v1558 = vmul.f32 %v1344, %v900
        %v1559 = vmul.f32 %v1347, %v901
        %v1560 = vmul.f32 %v1352, %v902
        %v1561 = vmul.f32 %v1355, %v903
        %v1562 = vmul.f32 %v1360, %v904
        %v1563 = vmul.f32 %v1363, %v905
        %v1564 = vmul.f32 %v1368, %v906
        %v1565 = vmul.f32 %v1371, %v907
        %1566 = vrot.lane.b32.xlu0 %v1312, 64
        %v1567 = vpop.permute.xlu0 %1566
        %1568 = vrot.lane.b32.xlu0 %v1315, 64
        %v1569 = vpop.permute.xlu0 %1568
        %1570 = vrot.lane.b32.xlu0 %v1320, 64
        %v1571 = vpop.permute.xlu0 %1570
        %1572 = vrot.lane.b32.xlu0 %v1323, 64
        %v1573 = vpop.permute.xlu0 %1572
        %1574 = vrot.lane.b32.xlu0 %v1328, 64
        %v1575 = vpop.permute.xlu0 %1574
        %1576 = vrot.lane.b32.xlu0 %v1331, 64
        %v1577 = vpop.permute.xlu0 %1576
        %1578 = vrot.lane.b32.xlu0 %v1336, 64
        %v1579 = vpop.permute.xlu0 %1578
        %1580 = vrot.lane.b32.xlu0 %v1339, 64
        %v1581 = vpop.permute.xlu0 %1580
        %1582 = vrot.lane.b32.xlu0 %v1344, 64
        %v1583 = vpop.permute.xlu0 %1582
        %1584 = vrot.lane.b32.xlu0 %v1347, 64
        %v1585 = vpop.permute.xlu0 %1584
        %1586 = vrot.lane.b32.xlu0 %v1352, 64
        %v1587 = vpop.permute.xlu0 %1586
        %1588 = vrot.lane.b32.xlu0 %v1355, 64
        %v1589 = vpop.permute.xlu0 %1588
        %1590 = vrot.lane.b32.xlu0 %v1360, 64
        %v1591 = vpop.permute.xlu0 %1590
        %1592 = vrot.lane.b32.xlu0 %v1363, 64
        %v1593 = vpop.permute.xlu0 %1592
        %1594 = vrot.lane.b32.xlu0 %v1368, 64
        %v1595 = vpop.permute.xlu0 %1594
        %1596 = vrot.lane.b32.xlu0 %v1371, 64
        %v1597 = vpop.permute.xlu0 %1596
        %v1598 = vmul.f32 %v1567, %v908
        %v1599 = vmul.f32 %v1569, %v909
        %v1600 = vmul.f32 %v1571, %v910
        %v1601 = vmul.f32 %v1573, %v911
        %v1602 = vmul.f32 %v1575, %v912
        %v1603 = vmul.f32 %v1577, %v913
        %v1604 = vmul.f32 %v1579, %v914
        %v1605 = vmul.f32 %v1581, %v915
        %v1606 = vmul.f32 %v1583, %v916
        %v1607 = vmul.f32 %v1585, %v917
        %v1608 = vmul.f32 %v1587, %v918
        %v1609 = vmul.f32 %v1589, %v919
        %v1610 = vmul.f32 %v1591, %v920
        %v1611 = vmul.f32 %v1593, %v921
        %v1612 = vmul.f32 %v1595, %v922
        %v1613 = vmul.f32 %v1597, %v923
        %v1614 = vadd.f32 %v1550, %v1598
        %v1615 = vadd.f32 %v1551, %v1599
        %v1616 = vadd.f32 %v1552, %v1600
        %v1617 = vadd.f32 %v1553, %v1601
        %v1618 = vadd.f32 %v1554, %v1602
        %v1619 = vadd.f32 %v1555, %v1603
        %v1620 = vadd.f32 %v1556, %v1604
        %v1621 = vadd.f32 %v1557, %v1605
        %v1622 = vadd.f32 %v1558, %v1606
        %v1623 = vadd.f32 %v1559, %v1607
        %v1624 = vadd.f32 %v1560, %v1608
        %v1625 = vadd.f32 %v1561, %v1609
        %v1626 = vadd.f32 %v1562, %v1610
        %v1627 = vadd.f32 %v1563, %v1611
        %v1628 = vadd.f32 %v1564, %v1612
        %v1629 = vadd.f32 %v1565, %v1613
        %v1630 = vpack.c.bf16 %v1615, %v1614
        %v1631 = vpack.c.bf16 %v1617, %v1616
        %v1632 = vpack.c.bf16 %v1619, %v1618
        %v1633 = vpack.c.bf16 %v1621, %v1620
        %v1634 = vpack.c.bf16 %v1623, %v1622
        %v1635 = vpack.c.bf16 %v1625, %v1624
        %v1636 = vpack.c.bf16 %v1627, %v1626
        %v1637 = vpack.c.bf16 %v1629, %v1628
        %v1646 = vunpack.c.l.b16 %v1630
        %v1647 = vunpack.c.h.b16 %v1630
        %v1648 = vunpack.c.l.b16 %v1631
        %v1649 = vunpack.c.h.b16 %v1631
        %v1650 = vunpack.c.l.b16 %v1632
        %v1651 = vunpack.c.h.b16 %v1632
        %v1652 = vunpack.c.l.b16 %v1633
        %v1653 = vunpack.c.h.b16 %v1633
        %v1654 = vunpack.c.l.b16 %v1634
        %v1655 = vunpack.c.h.b16 %v1634
        %v1656 = vunpack.c.l.b16 %v1635
        %v1657 = vunpack.c.h.b16 %v1635
        %v1658 = vunpack.c.l.b16 %v1636
        %v1659 = vunpack.c.h.b16 %v1636
        %v1660 = vunpack.c.l.b16 %v1637
        %v1661 = vunpack.c.h.b16 %v1637
        %v1662 = vpack.c.b16 %v1646, %v1646
        %v1663 = vpack.c.b16 %v1647, %v1647
        %v1664 = vpack.c.b16 %v1648, %v1648
        %v1665 = vpack.c.b16 %v1649, %v1649
        %v1666 = vpack.c.b16 %v1650, %v1650
        %v1667 = vpack.c.b16 %v1651, %v1651
        %v1668 = vpack.c.b16 %v1652, %v1652
        %v1669 = vpack.c.b16 %v1653, %v1653
        %v1670 = vpack.c.b16 %v1654, %v1654
        %v1671 = vpack.c.b16 %v1655, %v1655
        %v1672 = vpack.c.b16 %v1656, %v1656
        %v1673 = vpack.c.b16 %v1657, %v1657
        %v1674 = vpack.c.b16 %v1658, %v1658
        %v1675 = vpack.c.b16 %v1659, %v1659
        %v1676 = vpack.c.b16 %v1660, %v1660
        %v1677 = vpack.c.b16 %v1661, %v1661
        %1694 = vst [vmem:[%s588] sm:$0xf] %v1662
        %1695 = vst [vmem:[%s588 + $0x4] sm:$0xf] %v1663
        %1696 = vst [vmem:[%s588 + $0x8] sm:$0xf] %v1664
        %1697 = vst [vmem:[%s588 + $0xc] sm:$0xf] %v1665
        %1698 = vst [vmem:[%s588 + $0x10] sm:$0xf] %v1666
        %1699 = vst [vmem:[%s588 + $0x14] sm:$0xf] %v1667
        %1700 = vst [vmem:[%s588 + $0x18] sm:$0xf] %v1668
        %1701 = vst [vmem:[%s588 + $0x1c] sm:$0xf] %v1669
        %1702 = vst [vmem:[%s588 + $0x20] sm:$0xf] %v1670
        %1703 = vst [vmem:[%s588 + $0x24] sm:$0xf] %v1671
        %1704 = vst [vmem:[%s588 + $0x28] sm:$0xf] %v1672
        %1705 = vst [vmem:[%s588 + $0x2c] sm:$0xf] %v1673
        %1706 = vst [vmem:[%s588 + $0x30] sm:$0xf] %v1674
        %1707 = vst [vmem:[%s588 + $0x34] sm:$0xf] %v1675
        %1708 = vst [vmem:[%s588 + $0x38] sm:$0xf] %v1676
        %1709 = vst [vmem:[%s588 + $0x3c] sm:$0xf] %v1677
        %v1710 = vld [vmem:[%s526] sm:$0xf]
        %v1711 = vld [vmem:[%s526 + $0x4] sm:$0xf]
        %v1712 = vld [vmem:[%s526 + $0x8] sm:$0xf]
        %v1713 = vld [vmem:[%s526 + $0xc] sm:$0xf]
        %v1714 = vld [vmem:[%s526 + $0x10] sm:$0xf]
        %v1715 = vld [vmem:[%s526 + $0x14] sm:$0xf]
        %v1716 = vld [vmem:[%s526 + $0x18] sm:$0xf]
        %v1717 = vld [vmem:[%s526 + $0x1c] sm:$0xf]
        %v1718 = vld [vmem:[%s526 + $0x20] sm:$0xf]
        %v1719 = vld [vmem:[%s526 + $0x24] sm:$0xf]
        %v1720 = vld [vmem:[%s526 + $0x28] sm:$0xf]
        %v1721 = vld [vmem:[%s526 + $0x2c] sm:$0xf]
        %v1722 = vld [vmem:[%s526 + $0x30] sm:$0xf]
        %v1723 = vld [vmem:[%s526 + $0x34] sm:$0xf]
        %v1724 = vld [vmem:[%s526 + $0x38] sm:$0xf]
        %v1725 = vld [vmem:[%s526 + $0x3c] sm:$0xf]
        %v1726 = vld [vmem:[%s526 + $0x40] sm:$0xf]
        %v1727 = vld [vmem:[%s526 + $0x44] sm:$0xf]
        %v1728 = vld [vmem:[%s526 + $0x48] sm:$0xf]
        %v1729 = vld [vmem:[%s526 + $0x4c] sm:$0xf]
        %v1730 = vld [vmem:[%s526 + $0x50] sm:$0xf]
        %v1731 = vld [vmem:[%s526 + $0x54] sm:$0xf]
        %v1732 = vld [vmem:[%s526 + $0x58] sm:$0xf]
        %v1733 = vld [vmem:[%s526 + $0x5c] sm:$0xf]
        %v1734 = vld [vmem:[%s526 + $0x60] sm:$0xf]
        %v1735 = vld [vmem:[%s526 + $0x64] sm:$0xf]
        %v1736 = vld [vmem:[%s526 + $0x68] sm:$0xf]
        %v1737 = vld [vmem:[%s526 + $0x6c] sm:$0xf]
        %v1738 = vld [vmem:[%s526 + $0x70] sm:$0xf]
        %v1739 = vld [vmem:[%s526 + $0x74] sm:$0xf]
        %v1740 = vld [vmem:[%s526 + $0x78] sm:$0xf]
        %v1741 = vld [vmem:[%s526 + $0x7c] sm:$0xf]
        %v1774 = vunpack.c.l.b16 %v1710
        %v1775 = vunpack.c.l.b16 %v1711
        %v1776 = vunpack.c.l.b16 %v1712
        %v1777 = vunpack.c.l.b16 %v1713
        %v1778 = vunpack.c.l.b16 %v1714
        %v1779 = vunpack.c.l.b16 %v1715
        %v1780 = vunpack.c.l.b16 %v1716
        %v1781 = vunpack.c.l.b16 %v1717
        %v1782 = vunpack.c.l.b16 %v1718
        %v1783 = vunpack.c.l.b16 %v1719
        %v1784 = vunpack.c.l.b16 %v1720
        %v1785 = vunpack.c.l.b16 %v1721
        %v1786 = vunpack.c.l.b16 %v1722
        %v1787 = vunpack.c.l.b16 %v1723
        %v1788 = vunpack.c.l.b16 %v1724
        %v1789 = vunpack.c.l.b16 %v1725
        %v1790 = vunpack.c.l.b16 %v1726
        %v1791 = vunpack.c.l.b16 %v1727
        %v1792 = vunpack.c.l.b16 %v1728
        %v1793 = vunpack.c.l.b16 %v1729
        %v1794 = vunpack.c.l.b16 %v1730
        %v1795 = vunpack.c.l.b16 %v1731
        %v1796 = vunpack.c.l.b16 %v1732
        %v1797 = vunpack.c.l.b16 %v1733
        %v1798 = vunpack.c.l.b16 %v1734
        %v1799 = vunpack.c.l.b16 %v1735
        %v1800 = vunpack.c.l.b16 %v1736
        %v1801 = vunpack.c.l.b16 %v1737
        %v1802 = vunpack.c.l.b16 %v1738
        %v1803 = vunpack.c.l.b16 %v1739
        %v1804 = vunpack.c.l.b16 %v1740
        %v1805 = vunpack.c.l.b16 %v1741
        %v1806 = vpack.c.b16 %v1775, %v1774
        %v1807 = vpack.c.b16 %v1777, %v1776
        %v1808 = vpack.c.b16 %v1779, %v1778
        %v1809 = vpack.c.b16 %v1781, %v1780
        %v1810 = vpack.c.b16 %v1783, %v1782
        %v1811 = vpack.c.b16 %v1785, %v1784
        %v1812 = vpack.c.b16 %v1787, %v1786
        %v1813 = vpack.c.b16 %v1789, %v1788
        %v1814 = vpack.c.b16 %v1791, %v1790
        %v1815 = vpack.c.b16 %v1793, %v1792
        %v1816 = vpack.c.b16 %v1795, %v1794
        %v1817 = vpack.c.b16 %v1797, %v1796
        %v1818 = vpack.c.b16 %v1799, %v1798
        %v1819 = vpack.c.b16 %v1801, %v1800
        %v1820 = vpack.c.b16 %v1803, %v1802
        %v1821 = vpack.c.b16 %v1805, %v1804
        %1838 = vmatprep.subr.bf16.mxu0 0
        %1839 = vmatpush1.bf16.msra.mxu0 %v1806
        %1840 = vmatprep.subr.bf16.mxu0 0
        %1841 = vmatpush1.bf16.msra.mxu0 %v1807
        %1842 = vmatprep.subr.bf16.mxu0 0
        %1843 = vmatpush1.bf16.msra.mxu0 %v1808
        %1844 = vmatprep.subr.bf16.mxu0 0
        %1845 = vmatpush1.bf16.msra.mxu0 %v1809
        %1846 = vmatprep.subr.bf16.mxu0 0
        %1847 = vmatpush1.bf16.msra.mxu0 %v1810
        %1848 = vmatprep.subr.bf16.mxu0 0
        %1849 = vmatpush1.bf16.msra.mxu0 %v1811
        %1850 = vmatprep.subr.bf16.mxu0 0
        %1851 = vmatpush1.bf16.msra.mxu0 %v1812
        %1852 = vmatprep.subr.bf16.mxu0 0
        %1853 = vmatpush1.bf16.msra.mxu0 %v1813
        %1854 = vmatprep.subr.bf16.mxu0 0
        %1855 = vmatpush1.bf16.msra.mxu0 %v1814
        %1856 = vmatprep.subr.bf16.mxu0 0
        %1857 = vmatpush1.bf16.msra.mxu0 %v1815
        %1858 = vmatprep.subr.bf16.mxu0 0
        %1859 = vmatpush1.bf16.msra.mxu0 %v1816
        %1860 = vmatprep.subr.bf16.mxu0 0
        %1861 = vmatpush1.bf16.msra.mxu0 %v1817
        %1862 = vmatprep.subr.bf16.mxu0 0
        %1863 = vmatpush1.bf16.msra.mxu0 %v1818
        %1864 = vmatprep.subr.bf16.mxu0 0
        %1865 = vmatpush1.bf16.msra.mxu0 %v1819
        %1866 = vmatprep.subr.bf16.mxu0 0
        %1867 = vmatpush1.bf16.msra.mxu0 %v1820
        %1868 = vmatprep.subr.bf16.mxu0 0
        %1869 = vmatpush1.bf16.msra.mxu0 %v1821
        %1870 = vmatprep.mubr.bf16.mxu0 %v877
        %1871 = vmatmul.mubr.bf16.gmra.mrb[0].mxu0 %v876
        %v1872 = vpop.f32.mrb[0].mxu0
        %v1873 = vadd.f32 0.0, %v1872
        %v1874 = vpop.f32.mrb[0].mxu0
        %v1875 = vpop.f32.mrb[0].mxu0
        %v1876 = vadd.f32 0.0, %v1875
        %v1877 = vpop.f32.mrb[0].mxu0
        %1878 = vmatprep.mubr.bf16.mxu0 %v879
        %1879 = vmatmul.mubr.bf16.gmra.mrb[0].mxu0 %v878
        %v1880 = vpop.f32.mrb[0].mxu0
        %v1881 = vadd.f32 0.0, %v1880
        %v1882 = vpop.f32.mrb[0].mxu0
        %v1883 = vpop.f32.mrb[0].mxu0
        %v1884 = vadd.f32 0.0, %v1883
        %v1885 = vpop.f32.mrb[0].mxu0
        %1886 = vmatprep.mubr.bf16.mxu0 %v881
        %1887 = vmatmul.mubr.bf16.gmra.mrb[0].mxu0 %v880
        %v1888 = vpop.f32.mrb[0].mxu0
        %v1889 = vadd.f32 0.0, %v1888
        %v1890 = vpop.f32.mrb[0].mxu0
        %v1891 = vpop.f32.mrb[0].mxu0
        %v1892 = vadd.f32 0.0, %v1891
        %v1893 = vpop.f32.mrb[0].mxu0
        %1894 = vmatprep.mubr.bf16.mxu0 %v883
        %1895 = vmatmul.mubr.bf16.gmra.mrb[0].mxu0 %v882
        %v1896 = vpop.f32.mrb[0].mxu0
        %v1897 = vadd.f32 0.0, %v1896
        %v1898 = vpop.f32.mrb[0].mxu0
        %v1899 = vpop.f32.mrb[0].mxu0
        %v1900 = vadd.f32 0.0, %v1899
        %v1901 = vpop.f32.mrb[0].mxu0
        %1902 = vmatprep.mubr.bf16.mxu0 %v885
        %1903 = vmatmul.mubr.bf16.gmra.mrb[0].mxu0 %v884
        %v1904 = vpop.f32.mrb[0].mxu0
        %v1905 = vadd.f32 0.0, %v1904
        %v1906 = vpop.f32.mrb[0].mxu0
        %v1907 = vpop.f32.mrb[0].mxu0
        %v1908 = vadd.f32 0.0, %v1907
        %v1909 = vpop.f32.mrb[0].mxu0
        %1910 = vmatprep.mubr.bf16.mxu0 %v887
        %1911 = vmatmul.mubr.bf16.gmra.mrb[0].mxu0 %v886
        %v1912 = vpop.f32.mrb[0].mxu0
        %v1913 = vadd.f32 0.0, %v1912
        %v1914 = vpop.f32.mrb[0].mxu0
        %v1915 = vpop.f32.mrb[0].mxu0
        %v1916 = vadd.f32 0.0, %v1915
        %v1917 = vpop.f32.mrb[0].mxu0
        %1918 = vmatprep.mubr.bf16.mxu0 %v889
        %1919 = vmatmul.mubr.bf16.gmra.mrb[0].mxu0 %v888
        %v1920 = vpop.f32.mrb[0].mxu0
        %v1921 = vadd.f32 0.0, %v1920
        %v1922 = vpop.f32.mrb[0].mxu0
        %v1923 = vpop.f32.mrb[0].mxu0
        %v1924 = vadd.f32 0.0, %v1923
        %v1925 = vpop.f32.mrb[0].mxu0
        %1926 = vmatprep.mubr.bf16.mxu0 %v891
        %1927 = vmatmul.mubr.bf16.gmra.mrb[0].mxu0 %v890
        %v1928 = vpop.f32.mrb[0].mxu0
        %v1929 = vadd.f32 0.0, %v1928
        %v1930 = vpop.f32.mrb[0].mxu0
        %v1931 = vpop.f32.mrb[0].mxu0
        %v1932 = vadd.f32 0.0, %v1931
        %v1933 = vpop.f32.mrb[0].mxu0
        %1934 = vdwg.mxu0
        %v1935 = vpack.c.bf16 %v1876, %v1873
        %v1936 = vpack.c.bf16 %v1884, %v1881
        %v1937 = vpack.c.bf16 %v1892, %v1889
        %v1938 = vpack.c.bf16 %v1900, %v1897
        %v1939 = vpack.c.bf16 %v1908, %v1905
        %v1940 = vpack.c.bf16 %v1916, %v1913
        %v1941 = vpack.c.bf16 %v1924, %v1921
        %v1942 = vpack.c.bf16 %v1932, %v1929
        %v1951 = vunpack.c.l.b16 %v1935
        %v1952 = vunpack.c.h.b16 %v1935
        %v1953 = vunpack.c.l.b16 %v1936
        %v1954 = vunpack.c.h.b16 %v1936
        %v1955 = vunpack.c.l.b16 %v1937
        %v1956 = vunpack.c.h.b16 %v1937
        %v1957 = vunpack.c.l.b16 %v1938
        %v1958 = vunpack.c.h.b16 %v1938
        %v1959 = vunpack.c.l.b16 %v1939
        %v1960 = vunpack.c.h.b16 %v1939
        %v1961 = vunpack.c.l.b16 %v1940
        %v1962 = vunpack.c.h.b16 %v1940
        %v1963 = vunpack.c.l.b16 %v1941
        %v1964 = vunpack.c.h.b16 %v1941
        %v1965 = vunpack.c.l.b16 %v1942
        %v1966 = vunpack.c.h.b16 %v1942
        %v1967 = vpack.c.b16 %v1951, %v1951
        %v1968 = vpack.c.b16 %v1952, %v1952
        %v1969 = vpack.c.b16 %v1953, %v1953
        %v1970 = vpack.c.b16 %v1954, %v1954
        %v1971 = vpack.c.b16 %v1955, %v1955
        %v1972 = vpack.c.b16 %v1956, %v1956
        %v1973 = vpack.c.b16 %v1957, %v1957
        %v1974 = vpack.c.b16 %v1958, %v1958
        %v1975 = vpack.c.b16 %v1959, %v1959
        %v1976 = vpack.c.b16 %v1960, %v1960
        %v1977 = vpack.c.b16 %v1961, %v1961
        %v1978 = vpack.c.b16 %v1962, %v1962
        %v1979 = vpack.c.b16 %v1963, %v1963
        %v1980 = vpack.c.b16 %v1964, %v1964
        %v1981 = vpack.c.b16 %v1965, %v1965
        %v1982 = vpack.c.b16 %v1966, %v1966
        %1999 = vst [vmem:[%s595] sm:$0xf] %v1967
        %2000 = vst [vmem:[%s595 + $0x4] sm:$0xf] %v1968
        %2001 = vst [vmem:[%s595 + $0x8] sm:$0xf] %v1969
        %2002 = vst [vmem:[%s595 + $0xc] sm:$0xf] %v1970
        %2003 = vst [vmem:[%s595 + $0x10] sm:$0xf] %v1971
        %2004 = vst [vmem:[%s595 + $0x14] sm:$0xf] %v1972
        %2005 = vst [vmem:[%s595 + $0x18] sm:$0xf] %v1973
        %2006 = vst [vmem:[%s595 + $0x1c] sm:$0xf] %v1974
        %2007 = vst [vmem:[%s595 + $0x20] sm:$0xf] %v1975
        %2008 = vst [vmem:[%s595 + $0x24] sm:$0xf] %v1976
        %2009 = vst [vmem:[%s595 + $0x28] sm:$0xf] %v1977
        %2010 = vst [vmem:[%s595 + $0x2c] sm:$0xf] %v1978
        %2011 = vst [vmem:[%s595 + $0x30] sm:$0xf] %v1979
        %2012 = vst [vmem:[%s595 + $0x34] sm:$0xf] %v1980
        %2013 = vst [vmem:[%s595 + $0x38] sm:$0xf] %v1981
        %2014 = vst [vmem:[%s595 + $0x3c] sm:$0xf] %v1982
        %s2015 = sand.u32 %s249, 1
        %s2016 = scalar_lea.sflag [#allocation5], %s2015
        %s2017 = sand.u32 %s249, 1
        %s2018 = smul.addr %s2017, 64
        %s2019 = scalar_lea.vmem [#allocation14], %s2018
        %s2020 = sand.u32 %s39, 1
        %s2021 = scalar_lea.sflag [#allocation16], %s2020
        %s2022 = sand.u32 %s279, 1
        %s2023 = smul.addr %s2022, 64
        %s2024 = scalar_lea.vmem [#allocation15], %s2023
        %s2025 = sand.u32 %s39, 1
        %s2026 = scalar_lea.sflag [#allocation16], %s2025
        %s2027 = sand.u32 %s309, 1
        %s2028 = smul.addr %s2027, 64
        %s2029 = scalar_lea.vmem [#allocation17], %s2028
        // Predicated region
        $region77: #{tpu_custom_call.1} parent=47 // pred_check
          %p2030 = pneg %p259
        $region78: #{tpu_custom_call.1} parent=47 // pred_check_branch
          %2032 = sbr.rel (%p2030) target = $region80
        $region79: #{tpu_custom_call.1} parent=47 // pred_region
          %s2033 = smul.u32 16, %s45
          %s2035 = ssub.s32 1024, 1024
          %2036 = vsyncadd %s2016, %s2035
          %s2037 = smul.addr %s2033, 2
          %s2038 = sadd.s32 %s46, %s2037
          %s2039 = smul.addr %s44, 64
          %s2040 = sadd.s32 %s2038, %s2039
          %s2041 = smul.addr %s2040, 64
          %s2042 = scalar_lea.hbm %s7, %s2041
          %s2043 = sshll.u32 %s2019, 4
          %s2044 = int_to_ptr.vmem [resolvable:$true] %s2043
          %2049 = dma.vmem_to_hbm [thread:$0]  %s2044, 1024, %s2042, %s2016, 64, 128, 4
        $region80: #{tpu_custom_call.1} parent=47 // pred_fallthru
          _
        // Predicated region
        $region81: #{tpu_custom_call.1} parent=47 // pred_check
          %p2050 = pneg %p289
        $region82: #{tpu_custom_call.1} parent=47 // pred_check_branch
          %2052 = sbr.rel (%p2050) target = $region84
        $region83: #{tpu_custom_call.1} parent=47 // pred_region
          %s2053 = smul.u32 16, %s45
          %s2055 = ssub.s32 1024, 1024
          %2056 = vsyncadd %s2021, %s2055
          %s2057 = smul.addr %s2053, 2
          %s2058 = sadd.s32 %s46, %s2057
          %s2059 = smul.addr %s44, 64
          %s2060 = sadd.s32 %s2058, %s2059
          %s2061 = smul.addr %s2060, 64
          %s2062 = scalar_lea.hbm %s8, %s2061
          %s2063 = sshll.u32 %s2024, 4
          %s2064 = int_to_ptr.vmem [resolvable:$true] %s2063
          %2069 = dma.vmem_to_hbm [thread:$0]  %s2064, 1024, %s2062, %s2021, 64, 128, 4
        $region84: #{tpu_custom_call.1} parent=47 // pred_fallthru
          _
        // Predicated region
        $region85: #{tpu_custom_call.1} parent=47 // pred_check
          %p2070 = pneg %p319
        $region86: #{tpu_custom_call.1} parent=47 // pred_check_branch
          %2072 = sbr.rel (%p2070) target = $region88
        $region87: #{tpu_custom_call.1} parent=47 // pred_region
          %s2073 = smul.u32 16, %s45
          %s2075 = ssub.s32 1024, 1024
          %2076 = vsyncadd %s2026, %s2075
          %s2077 = smul.addr %s2073, 2
          %s2078 = sadd.s32 %s46, %s2077
          %s2079 = smul.addr %s44, 64
          %s2080 = sadd.s32 %s2078, %s2079
          %s2081 = smul.addr %s2080, 64
          %s2082 = scalar_lea.hbm %s9, %s2081
          %s2083 = sshll.u32 %s2029, 4
          %s2084 = int_to_ptr.vmem [resolvable:$true] %s2083
          %2089 = dma.vmem_to_hbm [thread:$0]  %s2084, 1024, %s2082, %s2026, 64, 128, 4
        $region88: #{tpu_custom_call.1} parent=47 // pred_fallthru
          _
      $region48: #{tpu_custom_call.1} parent=5 // pred_fallthru
        _
      %p2090 = scmp.le.s32.totalorder 2, %s34
      // Predicated region
      $region89: #{tpu_custom_call.1} parent=5 // pred_check
        %p2091 = pneg %p2090
      $region90: #{tpu_custom_call.1} parent=5 // pred_check_branch
        %2093 = sbr.rel (%p2091) target = $region92
      $region91: #{tpu_custom_call.1} parent=5 // pred_region
        %s2094 = ssub.s32 %s34, 2
        // Predicated region
        $region93: #{tpu_custom_call.1} parent=91 // pred_check
          %p2095 = pneg %p265
        $region94: #{tpu_custom_call.1} parent=91 // pred_check_branch
          %2097 = sbr.rel (%p2095) target = $region96
        $region95: #{tpu_custom_call.1} parent=91 // pred_region
          %s2098 = sand.u32 %s250, 1
          %s2099 = scalar_lea.sflag [#allocation5], %s2098
          %s2100 = sand.u32 %s250, 1
          %s2101 = smul.addr %s2100, 64
          %s2102 = scalar_lea.vmem [#allocation14], %s2101
          %2103 = dma.done %s2099, 1024
        $region96: #{tpu_custom_call.1} parent=91 // pred_fallthru
          _
        // Predicated region
        $region97: #{tpu_custom_call.1} parent=91 // pred_check
          %p2104 = pneg %p295
        $region98: #{tpu_custom_call.1} parent=91 // pred_check_branch
          %2106 = sbr.rel (%p2104) target = $region100
        $region99: #{tpu_custom_call.1} parent=91 // pred_region
          %s2107 = sand.u32 %s40, 1
          %s2108 = scalar_lea.sflag [#allocation16], %s2107
          %s2109 = sand.u32 %s280, 1
          %s2110 = smul.addr %s2109, 64
          %s2111 = scalar_lea.vmem [#allocation15], %s2110
          %2112 = dma.done %s2108, 1024
        $region100: #{tpu_custom_call.1} parent=91 // pred_fallthru
          _
        // Predicated region
        $region101: #{tpu_custom_call.1} parent=91 // pred_check
          %p2113 = pneg %p325
        $region102: #{tpu_custom_call.1} parent=91 // pred_check_branch
          %2115 = sbr.rel (%p2113) target = $region104
        $region103: #{tpu_custom_call.1} parent=91 // pred_region
          %s2116 = sand.u32 %s40, 1
          %s2117 = scalar_lea.sflag [#allocation16], %s2116
          %s2118 = sand.u32 %s310, 1
          %s2119 = smul.addr %s2118, 64
          %s2120 = scalar_lea.vmem [#allocation17], %s2119
          %2121 = dma.done %s2117, 1024
        $region104: #{tpu_custom_call.1} parent=91 // pred_fallthru
          _
      $region92: #{tpu_custom_call.1} parent=5 // pred_fallthru
        _
    $region6: #{tpu_custom_call.1} parent=1 // loop_footer
      %s38 = sadd.s32 1, %s34
    $region7: #{tpu_custom_call.1} parent=1 // loop_footer_branch
      %33 = sbr.rel target = $region3
    $region8: #{tpu_custom_call.1} parent=1 // loop_exit
      _
    %2122 = vsyncpa [#allocation4], 1
    %s2123 = scalar_lea.sflag [#allocation4], 1
    %2124 = vsyncpa %s2123, 1
    %2125 = vsyncpa [#allocation7], 1
    %s2126 = scalar_lea.sflag [#allocation7], 1
    %2127 = vsyncpa %s2126, 1
    %2128 = vsyncpa [#allocation10], 1
    %s2129 = scalar_lea.sflag [#allocation10], 1
    %2130 = vsyncpa %s2129, 1
    %2131 = vsyncpa [#allocation13], 1
    %s2132 = scalar_lea.sflag [#allocation13], 1
    %2133 = vsyncpa %s2132, 1
    %2134 = vsyncpa [#allocation5], 1
    %s2135 = scalar_lea.sflag [#allocation5], 1
    %2136 = vsyncpa %s2135, 1
    %2137 = vsyncpa [#allocation16], 1
    %s2138 = scalar_lea.sflag [#allocation16], 1
    %2139 = vsyncpa %s2138, 1

</llo_original>
